<compile_context>
chip_gen: v7x
topology: tpu7x:2x2x1
jax: 0.10.0
libtpu: 0.0.40
codegen_flags: <defaults>
</compile_context>

<pallas_src>
from functools import partial

import jax
import jax.numpy as jnp
from jax import lax
from jax.experimental import pallas as pl
from jax.experimental.pallas import tpu as pltpu


def _zero_halo(pad_ref):
    """Zero only the 1-pixel spatial halo of a (Hp, Wp, Cc) VMEM scratch."""
    Hp, Wp, Cc = pad_ref.shape
    z_row = jnp.zeros((1, Wp, Cc), pad_ref.dtype)
    z_col = jnp.zeros((Hp, 1, Cc), pad_ref.dtype)
    pad_ref[0:1, :, :] = z_row
    pad_ref[Hp - 1:Hp, :, :] = z_row
    pad_ref[:, 0:1, :] = z_col
    pad_ref[:, Wp - 1:Wp, :] = z_col


def _im2col_3x3(xpad, H, W):
    """xpad: (H+2, W+2, Cc) value -> (H*W, 9*Cc) im2col LHS (tap-major K order)."""
    Cc = xpad.shape[-1]
    cols = [xpad[ky:ky + H, kx:kx + W, :].reshape(H * W, Cc)
            for ky in range(3) for kx in range(3)]
    return jnp.concatenate(cols, axis=-1)


def _stage2_kernel(img_ref, txt_ref, w1_ref, b1_ref, w2_ref, b2_ref, o_ref,
                   xpad_ref, hpad_ref):
    # img_ref : (1, H, W, C)      bf16   stage-1 image, NHWC
    # txt_ref : (1, 1, T)         bf16   text embedding (broadcast in VMEM)
    # w1_ref  : (9*Cin, C1)       bf16   conv1 weights, im2col-folded
    # b1_ref  : (1, C1)           f32
    # w2_ref  : (C2, 9*C1)        bf16   conv2 weights, transposed + im2col-folded
    # b2_ref  : (C2, 1)           f32
    # o_ref   : (1, C2, H*W)      f32    lane-dense NCHW output
    # xpad_ref: (H+2, W+2, Cin)   f32    padded concat(image, text) staging
    # hpad_ref: (H+2, W+2, C1)    f32    padded hidden activation staging
    H, W, C = img_ref.shape[1], img_ref.shape[2], img_ref.shape[3]
    T = txt_ref.shape[2]
    C1 = w1_ref.shape[1]
    C2 = o_ref.shape[1]
    HW = H * W
    f32, bf16 = jnp.float32, jnp.bfloat16

    # ---- Stage zero-padded, channel-concatenated input in VMEM --------------
    # (text broadcast + concat done here: no (N,H,W,T) HBM expansion, no HBM pad)
    img = img_ref[0]                                             # (H, W, C)
    txt = jnp.broadcast_to(txt_ref[...], (H, W, T))              # (H, W, T)
    xpad_ref[1:H + 1, 1:W + 1, :] = jnp.concatenate([img, txt], axis=-1).astype(f32)
    _zero_halo(xpad_ref)       # halo only; interior fully overwritten each step

    # ---- Conv1: single im2col matmul (K = 9*Cin), bf16 operands, f32 acc ----
    col1 = _im2col_3x3(xpad_ref[...], H, W).astype(bf16)         # (HW, 9*Cin)
    h = jnp.dot(col1, w1_ref[...], preferred_element_type=f32)   # (HW, C1)
    h = jnp.maximum(h + b1_ref[...], 0.0)                        # ReLU

    # ---- Stage padded hidden activation -------------------------------------
    hpad_ref[1:H + 1, 1:W + 1, :] = h.reshape(H, W, C1)
    _zero_halo(hpad_ref)

    # ---- Conv2: single matmul in transposed form -> (C2, H*W) output --------
    # (lane dim = H*W: dense stores, and the result is already NCHW)
    col2 = _im2col_3x3(hpad_ref[...], H, W).astype(bf16)         # (HW, 9*C1)
    out = lax.dot_general(w2_ref[...], col2,
                          dimension_numbers=(((1,), (1,)), ((), ())),
                          preferred_element_type=f32)            # (C2, HW)
    out = jnp.tanh(out + b2_ref[...])
    o_ref[...] = out.reshape(1, C2, HW).astype(o_ref.dtype)


@partial(jax.jit, static_argnames=("image_size",))
def stage2_generator_forward(stage1_image, text_embedding, params, image_size):
    """stage1_image: (N, C, H, W) f32 NCHW; text_embedding: (N, T) f32.
    Returns (N, 3, H, W) f32 NCHW (matches the PyTorch module's forward)."""
    w1, b1, w2, b2 = params["w1"], params["b1"], params["w2"], params["b2"]
    N, C, H, W = stage1_image.shape
    T = text_embedding.shape[1]
    assert H == image_size and W == image_size
    Cin = C + T
    C1 = w1.shape[3]
    C2 = w2.shape[3]
    HW = H * W
    bf16 = jnp.bfloat16

    # Light glue only: no text expansion / concat / pad / output transpose in HBM.
    img_nhwc = jnp.transpose(stage1_image, (0, 2, 3, 1)).astype(bf16)   # (N,H,W,C)
    txt = text_embedding.reshape(N, 1, T).astype(bf16)                  # (N,1,T)
    # im2col-folded weights: conv1 RHS is (9*Cin, C1); conv2 is used in
    # transposed form (C2, 9*C1) so the kernel output is channels-first.
    w1r = w1.reshape(9 * Cin, C1).astype(bf16)
    w2t = jnp.transpose(w2, (3, 0, 1, 2)).reshape(C2, 9 * C1).astype(bf16)
    b1r = b1.reshape(1, C1).astype(jnp.float32)
    b2r = b2.reshape(C2, 1).astype(jnp.float32)

    out = pl.pallas_call(
        _stage2_kernel,
        out_shape=jax.ShapeDtypeStruct((N, C2, HW), jnp.float32),
        grid_spec=pltpu.PrefetchScalarGridSpec(
            num_scalar_prefetch=0,
            grid=(N,),
            in_specs=[
                pl.BlockSpec((1, H, W, C), lambda n: (n, 0, 0, 0)),
                pl.BlockSpec((1, 1, T), lambda n: (n, 0, 0)),
                pl.BlockSpec((9 * Cin, C1), lambda n: (0, 0)),
                pl.BlockSpec((1, C1), lambda n: (0, 0)),
                pl.BlockSpec((C2, 9 * C1), lambda n: (0, 0)),
                pl.BlockSpec((C2, 1), lambda n: (0, 0)),
            ],
            out_specs=pl.BlockSpec((1, C2, HW), lambda n: (n, 0, 0)),
            scratch_shapes=[
                pltpu.VMEM((H + 2, W + 2, Cin), jnp.float32),
                pltpu.VMEM((H + 2, W + 2, C1), jnp.float32),
            ],
        ),
        compiler_params=pltpu.CompilerParams(
            dimension_semantics=("parallel",),   # images independent (2 TCs on v7x)
            vmem_limit_bytes=32 * 1024 * 1024,
        ),
    )(img_nhwc, txt, w1r, b1r, w2t, b2r)

    return out.reshape(N, C2, H, W)   # free reshape: already channels-first


def _reference_forward(stage1_image, text_embedding, params, image_size):
    """Pure-JAX reference mirroring the kernel's numerics
    (bf16 conv operands, f32 accumulation / bias / activations)."""
    w1, b1, w2, b2 = params["w1"], params["b1"], params["w2"], params["b2"]
    N, C, H, W = stage1_image.shape
    T = text_embedding.shape[1]
    bf16 = jnp.bfloat16
    img = jnp.transpose(stage1_image, (0, 2, 3, 1)).astype(bf16)
    txt = jnp.broadcast_to(text_embedding.astype(bf16)[:, None, None, :], (N, H, W, T))
    x = jnp.concatenate([img, txt], axis=-1)
    dn = ("NHWC", "HWIO", "NHWC")
    y = lax.conv_general_dilated(x, w1.astype(bf16), (1, 1), "SAME",
                                 dimension_numbers=dn,
                                 preferred_element_type=jnp.float32)
    y = jnp.maximum(y + b1.reshape(1, 1, 1, -1), 0.0)
    y = lax.conv_general_dilated(y.astype(bf16), w2.astype(bf16), (1, 1), "SAME",
                                 dimension_numbers=dn,
                                 preferred_element_type=jnp.float32)
    y = jnp.tanh(y + b2.reshape(1, 1, 1, -1))
    return jnp.transpose(y, (0, 3, 1, 2))


if __name__ == "__main__":
    # Small, module-consistent shapes.
    N = 2
    stage1_image_channels = 4
    text_embedding_dim = 8
    image_size = 16
    C1, C2 = 64, 3
    Cin = stage1_image_channels + text_embedding_dim

    key = jax.random.PRNGKey(0)
    k_img, k_txt, k_w1, k_b1, k_w2, k_b2 = jax.random.split(key, 6)

    stage1_image = jax.random.normal(
        k_img, (N, stage1_image_channels, image_size, image_size), jnp.float32)
    text_embedding = jax.random.normal(k_txt, (N, text_embedding_dim), jnp.float32)

    # Deterministic parameter init (HWIO layout for conv weights).
    params = {
        "w1": 0.1 * jax.random.normal(k_w1, (3, 3, Cin, C1), jnp.float32),
        "b1": 0.1 * jax.random.normal(k_b1, (1, C1), jnp.float32),
        "w2": 0.1 * jax.random.normal(k_w2, (3, 3, C1, C2), jnp.float32),
        "b2": 0.1 * jax.random.normal(k_b2, (1, C2), jnp.float32),
    }

    out = stage2_generator_forward(stage1_image, text_embedding, params,
                                   image_size=image_size)
    out = jax.block_until_ready(out)

    ref = _reference_forward(stage1_image, text_embedding, params, image_size)
    ref = jax.block_until_ready(ref)

    assert out.shape == (N, 3, image_size, image_size)
    # Tolerance relaxed vs the f32-only version because conv operands are bf16
    # (the reference mirrors that, so remaining error is accumulation order only).
    assert jnp.allclose(out, ref, atol=1e-2, rtol=1e-2), "mismatch vs JAX reference"
    print("KERNEL_OK")
</pallas_src>

<mosaic_0001>
module attributes {stable_mosaic.version = 11 : i64} {
  func.func @_stage2_kernel(%arg0: i32, %arg1: memref<1x16x16x4xbf16, #tpu.memory_space<vmem>>, %arg2: memref<1x1x8xbf16, #tpu.memory_space<vmem>>, %arg3: memref<108x64xbf16, #tpu.memory_space<vmem>>, %arg4: memref<1x64xf32, #tpu.memory_space<vmem>>, %arg5: memref<3x576xbf16, #tpu.memory_space<vmem>>, %arg6: memref<3x1xf32, #tpu.memory_space<vmem>>, %arg7: memref<1x3x256xf32, #tpu.memory_space<vmem>>, %arg8: memref<18x18x12xf32, #tpu.memory_space<vmem>>, %arg9: memref<18x18x64xf32, #tpu.memory_space<vmem>>) attributes {dimension_semantics = [#tpu.dimension_semantics<parallel>], iteration_bounds = array<i64: 2>, scalar_prefetch = 0 : i64, scratch_operands = 2 : i64, tpu.core_type = #tpu.core_type<tc>, window_params = [{transform_indices = @transform_0, window_bounds = array<i64: 1, 16, 16, 4>}, {transform_indices = @transform_1, window_bounds = array<i64: 1, 1, 8>}, {pipeline_mode = #tpu.pipeline_mode<synchronous>, transform_indices = @transform_2, window_bounds = array<i64: 108, 64>}, {pipeline_mode = #tpu.pipeline_mode<synchronous>, transform_indices = @transform_3, window_bounds = array<i64: 1, 64>}, {pipeline_mode = #tpu.pipeline_mode<synchronous>, transform_indices = @transform_4, window_bounds = array<i64: 3, 576>}, {pipeline_mode = #tpu.pipeline_mode<synchronous>, transform_indices = @transform_5, window_bounds = array<i64: 3, 1>}, {transform_indices = @transform_6, window_bounds = array<i64: 1, 3, 256>}]} {
    %c0 = arith.constant 0 : index
    %c0_0 = arith.constant 0 : index
    %c0_1 = arith.constant 0 : index
    %c0_2 = arith.constant 0 : index
    %0 = vector.load %arg1[%c0, %c0_0, %c0_1, %c0_2] : memref<1x16x16x4xbf16, #tpu.memory_space<vmem>>, vector<1x16x16x4xbf16>
    %1 = vector.shape_cast %0 : vector<1x16x16x4xbf16> to vector<16x16x4xbf16>
    %c0_3 = arith.constant 0 : index
    %c0_4 = arith.constant 0 : index
    %c0_5 = arith.constant 0 : index
    %2 = vector.load %arg2[%c0_3, %c0_4, %c0_5] : memref<1x1x8xbf16, #tpu.memory_space<vmem>>, vector<1x1x8xbf16>
    %3 = vector.shape_cast %2 : vector<1x1x8xbf16> to vector<1x1x8xbf16>
    %4 = vector.broadcast %3 : vector<1x1x8xbf16> to vector<16x16x8xbf16>
    %5 = tpu.concatenate %1, %4 in 2 : vector<16x16x4xbf16>, vector<16x16x8xbf16> -> vector<16x16x12xbf16>
    %6 = arith.extf %5 : vector<16x16x12xbf16> to vector<16x16x12xf32>
    %c1 = arith.constant 1 : index
    %c1_6 = arith.constant 1 : index
    %c0_7 = arith.constant 0 : index
    %7 = vector.load %arg8[%c1, %c1_6, %c0_7] : memref<18x18x12xf32, #tpu.memory_space<vmem>>, vector<16x16x12xf32>
    tpu.vector_store %arg8[%c1, %c1_6, %c0_7], %6 {strides = array<i32>} : memref<18x18x12xf32, #tpu.memory_space<vmem>>, vector<16x16x12xf32>,
    %cst = arith.constant 0.000000e+00 : f32
    %8 = vector.broadcast %cst : f32 to vector<1x18x12xf32>
    %cst_8 = arith.constant 0.000000e+00 : f32
    %9 = vector.broadcast %cst_8 : f32 to vector<18x1x12xf32>
    %c0_9 = arith.constant 0 : index
    %c0_10 = arith.constant 0 : index
    %c0_11 = arith.constant 0 : index
    %10 = vector.load %arg8[%c0_9, %c0_10, %c0_11] : memref<18x18x12xf32, #tpu.memory_space<vmem>>, vector<1x18x12xf32>
    tpu.vector_store %arg8[%c0_9, %c0_10, %c0_11], %8 {strides = array<i32>} : memref<18x18x12xf32, #tpu.memory_space<vmem>>, vector<1x18x12xf32>,
    %c17 = arith.constant 17 : index
    %c0_12 = arith.constant 0 : index
    %c0_13 = arith.constant 0 : index
    %11 = vector.load %arg8[%c17, %c0_12, %c0_13] : memref<18x18x12xf32, #tpu.memory_space<vmem>>, vector<1x18x12xf32>
    tpu.vector_store %arg8[%c17, %c0_12, %c0_13], %8 {strides = array<i32>} : memref<18x18x12xf32, #tpu.memory_space<vmem>>, vector<1x18x12xf32>,
    %c0_14 = arith.constant 0 : index
    %c0_15 = arith.constant 0 : index
    %c0_16 = arith.constant 0 : index
    %12 = vector.load %arg8[%c0_14, %c0_15, %c0_16] : memref<18x18x12xf32, #tpu.memory_space<vmem>>, vector<18x1x12xf32>
    tpu.vector_store %arg8[%c0_14, %c0_15, %c0_16], %9 {strides = array<i32>} : memref<18x18x12xf32, #tpu.memory_space<vmem>>, vector<18x1x12xf32>,
    %c0_17 = arith.constant 0 : index
    %c17_18 = arith.constant 17 : index
    %c0_19 = arith.constant 0 : index
    %13 = vector.load %arg8[%c0_17, %c17_18, %c0_19] : memref<18x18x12xf32, #tpu.memory_space<vmem>>, vector<18x1x12xf32>
    tpu.vector_store %arg8[%c0_17, %c17_18, %c0_19], %9 {strides = array<i32>} : memref<18x18x12xf32, #tpu.memory_space<vmem>>, vector<18x1x12xf32>,
    %c0_20 = arith.constant 0 : index
    %c0_21 = arith.constant 0 : index
    %c0_22 = arith.constant 0 : index
    %14 = vector.load %arg8[%c0_20, %c0_21, %c0_22] : memref<18x18x12xf32, #tpu.memory_space<vmem>>, vector<18x18x12xf32>
    %15 = vector.extract_strided_slice %14 {offsets = [0, 0, 0], sizes = [16, 16, 12], strides = [1, 1, 1]} : vector<18x18x12xf32> to vector<16x16x12xf32>
    %16 = vector.shape_cast %15 : vector<16x16x12xf32> to vector<256x12xf32>
    %17 = vector.extract_strided_slice %14 {offsets = [0, 1, 0], sizes = [16, 16, 12], strides = [1, 1, 1]} : vector<18x18x12xf32> to vector<16x16x12xf32>
    %18 = vector.shape_cast %17 : vector<16x16x12xf32> to vector<256x12xf32>
    %19 = vector.extract_strided_slice %14 {offsets = [0, 2, 0], sizes = [16, 16, 12], strides = [1, 1, 1]} : vector<18x18x12xf32> to vector<16x16x12xf32>
    %20 = vector.shape_cast %19 : vector<16x16x12xf32> to vector<256x12xf32>
    %21 = vector.extract_strided_slice %14 {offsets = [1, 0, 0], sizes = [16, 16, 12], strides = [1, 1, 1]} : vector<18x18x12xf32> to vector<16x16x12xf32>
    %22 = vector.shape_cast %21 : vector<16x16x12xf32> to vector<256x12xf32>
    %23 = vector.extract_strided_slice %14 {offsets = [1, 1, 0], sizes = [16, 16, 12], strides = [1, 1, 1]} : vector<18x18x12xf32> to vector<16x16x12xf32>
    %24 = vector.shape_cast %23 : vector<16x16x12xf32> to vector<256x12xf32>
    %25 = vector.extract_strided_slice %14 {offsets = [1, 2, 0], sizes = [16, 16, 12], strides = [1, 1, 1]} : vector<18x18x12xf32> to vector<16x16x12xf32>
    %26 = vector.shape_cast %25 : vector<16x16x12xf32> to vector<256x12xf32>
    %27 = vector.extract_strided_slice %14 {offsets = [2, 0, 0], sizes = [16, 16, 12], strides = [1, 1, 1]} : vector<18x18x12xf32> to vector<16x16x12xf32>
    %28 = vector.shape_cast %27 : vector<16x16x12xf32> to vector<256x12xf32>
    %29 = vector.extract_strided_slice %14 {offsets = [2, 1, 0], sizes = [16, 16, 12], strides = [1, 1, 1]} : vector<18x18x12xf32> to vector<16x16x12xf32>
    %30 = vector.shape_cast %29 : vector<16x16x12xf32> to vector<256x12xf32>
    %31 = vector.extract_strided_slice %14 {offsets = [2, 2, 0], sizes = [16, 16, 12], strides = [1, 1, 1]} : vector<18x18x12xf32> to vector<16x16x12xf32>
    %32 = vector.shape_cast %31 : vector<16x16x12xf32> to vector<256x12xf32>
    %33 = tpu.concatenate %16, %18, %20, %22, %24, %26, %28, %30, %32 in 1 : vector<256x12xf32>, vector<256x12xf32>, vector<256x12xf32>, vector<256x12xf32>, vector<256x12xf32>, vector<256x12xf32>, vector<256x12xf32>, vector<256x12xf32>, vector<256x12xf32> -> vector<256x108xf32>
    %34 = arith.truncf %33 : vector<256x108xf32> to vector<256x108xbf16>
    %c0_23 = arith.constant 0 : index
    %c0_24 = arith.constant 0 : index
    %35 = vector.load %arg3[%c0_23, %c0_24] : memref<108x64xbf16, #tpu.memory_space<vmem>>, vector<108x64xbf16>
    %cst_25 = arith.constant dense<0.000000e+00> : vector<256x64xf32>
    %36 = tpu.matmul %34, %35, %cst_25 {dimension_numbers = #tpu.dot_dimension_numbers<[1], [0], [0], [1], [0, 0, 1, 1], [], []>} : vector<256x108xbf16>, vector<108x64xbf16>, vector<256x64xf32> -> vector<256x64xf32>
    %c0_26 = arith.constant 0 : index
    %c0_27 = arith.constant 0 : index
    %37 = vector.load %arg4[%c0_26, %c0_27] : memref<1x64xf32, #tpu.memory_space<vmem>>, vector<1x64xf32>
    %38 = vector.broadcast %37 : vector<1x64xf32> to vector<256x64xf32>
    %39 = arith.addf %36, %38 : vector<256x64xf32>
    %cst_28 = arith.constant 0.000000e+00 : f32
    %40 = vector.broadcast %cst_28 : f32 to vector<256x64xf32>
    %41 = arith.maximumf %39, %40 : vector<256x64xf32>
    %42 = vector.shape_cast %41 : vector<256x64xf32> to vector<16x16x64xf32>
    %c1_29 = arith.constant 1 : index
    %c1_30 = arith.constant 1 : index
    %c0_31 = arith.constant 0 : index
    %43 = vector.load %arg9[%c1_29, %c1_30, %c0_31] : memref<18x18x64xf32, #tpu.memory_space<vmem>>, vector<16x16x64xf32>
    tpu.vector_store %arg9[%c1_29, %c1_30, %c0_31], %42 {strides = array<i32>} : memref<18x18x64xf32, #tpu.memory_space<vmem>>, vector<16x16x64xf32>,
    %cst_32 = arith.constant 0.000000e+00 : f32
    %44 = vector.broadcast %cst_32 : f32 to vector<1x18x64xf32>
    %cst_33 = arith.constant 0.000000e+00 : f32
    %45 = vector.broadcast %cst_33 : f32 to vector<18x1x64xf32>
    %c0_34 = arith.constant 0 : index
    %c0_35 = arith.constant 0 : index
    %c0_36 = arith.constant 0 : index
    %46 = vector.load %arg9[%c0_34, %c0_35, %c0_36] : memref<18x18x64xf32, #tpu.memory_space<vmem>>, vector<1x18x64xf32>
    tpu.vector_store %arg9[%c0_34, %c0_35, %c0_36], %44 {strides = array<i32>} : memref<18x18x64xf32, #tpu.memory_space<vmem>>, vector<1x18x64xf32>,
    %c17_37 = arith.constant 17 : index
    %c0_38 = arith.constant 0 : index
    %c0_39 = arith.constant 0 : index
    %47 = vector.load %arg9[%c17_37, %c0_38, %c0_39] : memref<18x18x64xf32, #tpu.memory_space<vmem>>, vector<1x18x64xf32>
    tpu.vector_store %arg9[%c17_37, %c0_38, %c0_39], %44 {strides = array<i32>} : memref<18x18x64xf32, #tpu.memory_space<vmem>>, vector<1x18x64xf32>,
    %c0_40 = arith.constant 0 : index
    %c0_41 = arith.constant 0 : index
    %c0_42 = arith.constant 0 : index
    %48 = vector.load %arg9[%c0_40, %c0_41, %c0_42] : memref<18x18x64xf32, #tpu.memory_space<vmem>>, vector<18x1x64xf32>
    tpu.vector_store %arg9[%c0_40, %c0_41, %c0_42], %45 {strides = array<i32>} : memref<18x18x64xf32, #tpu.memory_space<vmem>>, vector<18x1x64xf32>,
    %c0_43 = arith.constant 0 : index
    %c17_44 = arith.constant 17 : index
    %c0_45 = arith.constant 0 : index
    %49 = vector.load %arg9[%c0_43, %c17_44, %c0_45] : memref<18x18x64xf32, #tpu.memory_space<vmem>>, vector<18x1x64xf32>
    tpu.vector_store %arg9[%c0_43, %c17_44, %c0_45], %45 {strides = array<i32>} : memref<18x18x64xf32, #tpu.memory_space<vmem>>, vector<18x1x64xf32>,
    %c0_46 = arith.constant 0 : index
    %c0_47 = arith.constant 0 : index
    %c0_48 = arith.constant 0 : index
    %50 = vector.load %arg9[%c0_46, %c0_47, %c0_48] : memref<18x18x64xf32, #tpu.memory_space<vmem>>, vector<18x18x64xf32>
    %51 = vector.extract_strided_slice %50 {offsets = [0, 0, 0], sizes = [16, 16, 64], strides = [1, 1, 1]} : vector<18x18x64xf32> to vector<16x16x64xf32>
    %52 = vector.shape_cast %51 : vector<16x16x64xf32> to vector<256x64xf32>
    %53 = vector.extract_strided_slice %50 {offsets = [0, 1, 0], sizes = [16, 16, 64], strides = [1, 1, 1]} : vector<18x18x64xf32> to vector<16x16x64xf32>
    %54 = vector.shape_cast %53 : vector<16x16x64xf32> to vector<256x64xf32>
    %55 = vector.extract_strided_slice %50 {offsets = [0, 2, 0], sizes = [16, 16, 64], strides = [1, 1, 1]} : vector<18x18x64xf32> to vector<16x16x64xf32>
    %56 = vector.shape_cast %55 : vector<16x16x64xf32> to vector<256x64xf32>
    %57 = vector.extract_strided_slice %50 {offsets = [1, 0, 0], sizes = [16, 16, 64], strides = [1, 1, 1]} : vector<18x18x64xf32> to vector<16x16x64xf32>
    %58 = vector.shape_cast %57 : vector<16x16x64xf32> to vector<256x64xf32>
    %59 = vector.extract_strided_slice %50 {offsets = [1, 1, 0], sizes = [16, 16, 64], strides = [1, 1, 1]} : vector<18x18x64xf32> to vector<16x16x64xf32>
    %60 = vector.shape_cast %59 : vector<16x16x64xf32> to vector<256x64xf32>
    %61 = vector.extract_strided_slice %50 {offsets = [1, 2, 0], sizes = [16, 16, 64], strides = [1, 1, 1]} : vector<18x18x64xf32> to vector<16x16x64xf32>
    %62 = vector.shape_cast %61 : vector<16x16x64xf32> to vector<256x64xf32>
    %63 = vector.extract_strided_slice %50 {offsets = [2, 0, 0], sizes = [16, 16, 64], strides = [1, 1, 1]} : vector<18x18x64xf32> to vector<16x16x64xf32>
    %64 = vector.shape_cast %63 : vector<16x16x64xf32> to vector<256x64xf32>
    %65 = vector.extract_strided_slice %50 {offsets = [2, 1, 0], sizes = [16, 16, 64], strides = [1, 1, 1]} : vector<18x18x64xf32> to vector<16x16x64xf32>
    %66 = vector.shape_cast %65 : vector<16x16x64xf32> to vector<256x64xf32>
    %67 = vector.extract_strided_slice %50 {offsets = [2, 2, 0], sizes = [16, 16, 64], strides = [1, 1, 1]} : vector<18x18x64xf32> to vector<16x16x64xf32>
    %68 = vector.shape_cast %67 : vector<16x16x64xf32> to vector<256x64xf32>
    %69 = tpu.concatenate %52, %54, %56, %58, %60, %62, %64, %66, %68 in 1 : vector<256x64xf32>, vector<256x64xf32>, vector<256x64xf32>, vector<256x64xf32>, vector<256x64xf32>, vector<256x64xf32>, vector<256x64xf32>, vector<256x64xf32>, vector<256x64xf32> -> vector<256x576xf32>
    %70 = arith.truncf %69 : vector<256x576xf32> to vector<256x576xbf16>
    %c0_49 = arith.constant 0 : index
    %c0_50 = arith.constant 0 : index
    %71 = vector.load %arg5[%c0_49, %c0_50] : memref<3x576xbf16, #tpu.memory_space<vmem>>, vector<3x576xbf16>
    %cst_51 = arith.constant dense<0.000000e+00> : vector<3x256xf32>
    %72 = tpu.matmul %71, %70, %cst_51 {dimension_numbers = #tpu.dot_dimension_numbers<[1], [1], [0], [0], [0, 0, 1, 0], [], []>} : vector<3x576xbf16>, vector<256x576xbf16>, vector<3x256xf32> -> vector<3x256xf32>
    %c0_52 = arith.constant 0 : index
    %c0_53 = arith.constant 0 : index
    %73 = vector.load %arg6[%c0_52, %c0_53] : memref<3x1xf32, #tpu.memory_space<vmem>>, vector<3x1xf32>
    %74 = vector.broadcast %73 : vector<3x1xf32> to vector<3x256xf32>
    %75 = arith.addf %72, %74 : vector<3x256xf32>
    %76 = math.tanh %75 : vector<3x256xf32>
    %77 = vector.shape_cast %76 : vector<3x256xf32> to vector<1x3x256xf32>
    %c0_54 = arith.constant 0 : index
    %c0_55 = arith.constant 0 : index
    %c0_56 = arith.constant 0 : index
    %78 = vector.load %arg7[%c0_54, %c0_55, %c0_56] : memref<1x3x256xf32, #tpu.memory_space<vmem>>, vector<1x3x256xf32>
    tpu.vector_store %arg7[%c0_54, %c0_55, %c0_56], %77 {strides = array<i32>} : memref<1x3x256xf32, #tpu.memory_space<vmem>>, vector<1x3x256xf32>,
    return
  }
  func.func @transform_0(%arg0: i32) -> (i32, i32, i32, i32) {
    %c0_i32 = arith.constant 0 : i32
    %c0_i32_0 = arith.constant 0 : i32
    %c0_i32_1 = arith.constant 0 : i32
    %c0_i32_2 = arith.constant 0 : i32
    return %arg0, %c0_i32, %c0_i32_0, %c0_i32_1 : i32, i32, i32, i32
  }
  func.func @transform_1(%arg0: i32) -> (i32, i32, i32) {
    %c0_i32 = arith.constant 0 : i32
    %c0_i32_0 = arith.constant 0 : i32
    %c0_i32_1 = arith.constant 0 : i32
    return %arg0, %c0_i32, %c0_i32_0 : i32, i32, i32
  }
  func.func @transform_2(%arg0: i32) -> (i32, i32) {
    %c0_i32 = arith.constant 0 : i32
    %c0_i32_0 = arith.constant 0 : i32
    %c0_i32_1 = arith.constant 0 : i32
    return %c0_i32, %c0_i32_0 : i32, i32
  }
  func.func @transform_3(%arg0: i32) -> (i32, i32) {
    %c0_i32 = arith.constant 0 : i32
    %c0_i32_0 = arith.constant 0 : i32
    %c0_i32_1 = arith.constant 0 : i32
    return %c0_i32, %c0_i32_0 : i32, i32
  }
  func.func @transform_4(%arg0: i32) -> (i32, i32) {
    %c0_i32 = arith.constant 0 : i32
    %c0_i32_0 = arith.constant 0 : i32
    %c0_i32_1 = arith.constant 0 : i32
    return %c0_i32, %c0_i32_0 : i32, i32
  }
  func.func @transform_5(%arg0: i32) -> (i32, i32) {
    %c0_i32 = arith.constant 0 : i32
    %c0_i32_0 = arith.constant 0 : i32
    %c0_i32_1 = arith.constant 0 : i32
    return %c0_i32, %c0_i32_0 : i32, i32
  }
  func.func @transform_6(%arg0: i32) -> (i32, i32, i32) {
    %c0_i32 = arith.constant 0 : i32
    %c0_i32_0 = arith.constant 0 : i32
    %c0_i32_1 = arith.constant 0 : i32
    return %arg0, %c0_i32, %c0_i32_0 : i32, i32, i32
  }
}

</mosaic_0001>

<llo_original>
// kernel: stage2_generator_forward.1
$region0: #{stage2_generator_forward.1}
  #allocation0 [shape = 'u32[]', space=smem, size = 0x4, offset = 0x4, fixed_abs, tag = 'smem constant byte address 0x4 - core index']
  #allocation1 [shape = 'u32[144,128]{1,0:T(1,128)}', space=vmem, size = 0x12000, scoped, tag = 'internal scratch']
  #allocation2 [shape = 'f32[18,18,12]{2,1,0:T(8,128)}', space=vmem, size = 0x36000, scoped, tag = 'scratch operand']
  #allocation3 [shape = 'f32[18,18,64]{2,1,0:T(8,128)}', space=vmem, size = 0x36000, scoped, tag = 'scratch operand']
  %s0 = inlined_call_operand.vmem [shape: bf16[2,16,16,4], index: 0, kind: input, shape index: {}]
  %s1 = inlined_call_operand.vmem [shape: bf16[2,1,8], index: 1, kind: input, shape index: {}]
  %s2 = inlined_call_operand.vmem [shape: bf16[108,64], index: 2, kind: input, shape index: {}]
  %s3 = inlined_call_operand.vmem [shape: f32[1,64], index: 3, kind: input, shape index: {}]
  %s4 = inlined_call_operand.vmem [shape: bf16[3,576], index: 4, kind: input, shape index: {}]
  %s5 = inlined_call_operand.vmem [shape: f32[3,1], index: 5, kind: input, shape index: {}]
  %s6 = inlined_call_operand.vmem [shape: f32[2,3,256], index: 6, kind: output, shape index: {}]
  %s7 = sld [smem:[#allocation0]]
  $region57: #{stage2_generator_forward.1} parent=0
    _
  %s9 = ssub.s32 1, %s7
  %s10 = scalar_select 0, %s9, %s7
  loop: start=0, step=1, limit=4
  $region2: #{stage2_generator_forward.1} parent=0 // loop_pre_header
    _
  $region3: #{stage2_generator_forward.1} parent=0 // loop_header
    %s12 = sphi 0, %s16
    %p13 = scmp.ge.s32.totalorder %s12, 4
    %s22 = sphi 0, %s24
    %s25 = sphi 0, %s22
    %s26 = sphi 0, %s25
    %s42 = sphi 0, %s26
    %s48 = sphi 0, %s50
    %s51 = sphi 0, %s48
    %s52 = sphi 0, %s51
    %s68 = sphi 0, %s52
    %s72 = sphi 0, %s72
    %s74 = sphi 0, %s72
    %s75 = sphi 0, %s74
    %s89 = sphi 0, %s75
    %s93 = sphi 0, %s93
    %s95 = sphi 0, %s93
    %s96 = sphi 0, %s95
    %s110 = sphi 0, %s96
    %s114 = sphi 0, %s114
    %s116 = sphi 0, %s114
    %s117 = sphi 0, %s116
    %s131 = sphi 0, %s117
    %s135 = sphi 0, %s135
    %s137 = sphi 0, %s135
    %s138 = sphi 0, %s137
    %s152 = sphi 0, %s138
    %s158 = sphi 0, %s160
    %s161 = sphi 0, %s158
    %s162 = sphi 0, %s161
    %s178 = sphi 0, %s162
  $region4: #{stage2_generator_forward.1} parent=0 // loop_header_branch
    %15 = sbr.rel (%p13) target = $region8
  $region5: #{stage2_generator_forward.1} parent=0 // loop_body
    %s17 = ssub.s32 %s12, 1
    %s18 = ssub.s32 %s12, 2
    %s19 = sadd.s32 %s12, 1
    %s20 = ssub.s32 %s12, %s19
    %p21 = scmp.eq.s32.totalorder %s20, 0
    %s23 = sadd.s32 %s22, 1
    %s24 = scalar_select %p21, %s22, %s23
    %p27 = pneg %p21
    %p28 = scmp.eq.s32.totalorder %s12, 1
    %p29 = por %p27, %p28
    %p30 = scmp.ne.s32.totalorder %s22, %s25
    %p31 = scmp.eq.s32.totalorder %s12, 0
    %p32 = por %p30, %p31
    %p33 = scmp.ne.s32.totalorder %s22, %s25
    %p34 = scmp.eq.s32.totalorder %s17, 1
    %p35 = por %p33, %p34
    %p36 = scmp.ne.s32.totalorder %s25, %s26
    %p37 = scmp.eq.s32.totalorder %s17, 0
    %p38 = por %p36, %p37
    %p39 = scmp.ne.s32.totalorder %s25, %s26
    %p40 = scmp.eq.s32.totalorder %s18, 1
    %p41 = por %p39, %p40
    %p43 = scmp.ne.s32.totalorder %s26, %s42
    %p44 = scmp.eq.s32.totalorder %s18, 0
    %p45 = por %p43, %p44
    %s46 = ssub.s32 %s12, %s19
    %p47 = scmp.eq.s32.totalorder %s46, 0
    %s49 = sadd.s32 %s48, 1
    %s50 = scalar_select %p47, %s48, %s49
    %p53 = pneg %p47
    %p54 = scmp.eq.s32.totalorder %s12, 1
    %p55 = por %p53, %p54
    %p56 = scmp.ne.s32.totalorder %s48, %s51
    %p57 = scmp.eq.s32.totalorder %s12, 0
    %p58 = por %p56, %p57
    %p59 = scmp.ne.s32.totalorder %s48, %s51
    %p60 = scmp.eq.s32.totalorder %s17, 1
    %p61 = por %p59, %p60
    %p62 = scmp.ne.s32.totalorder %s51, %s52
    %p63 = scmp.eq.s32.totalorder %s17, 0
    %p64 = por %p62, %p63
    %p65 = scmp.ne.s32.totalorder %s51, %s52
    %p66 = scmp.eq.s32.totalorder %s18, 1
    %p67 = por %p65, %p66
    %p69 = scmp.ne.s32.totalorder %s52, %s68
    %p70 = scmp.eq.s32.totalorder %s18, 0
    %p71 = por %p69, %p70
    %s73 = sadd.s32 %s72, 1
    %p76 = scmp.eq.s32.totalorder %s12, 1
    %p77 = scmp.ne.s32.totalorder %s72, %s74
    %p78 = scmp.eq.s32.totalorder %s12, 0
    %p79 = por %p77, %p78
    %p80 = scmp.ne.s32.totalorder %s72, %s74
    %p81 = scmp.eq.s32.totalorder %s17, 1
    %p82 = por %p80, %p81
    %p83 = scmp.ne.s32.totalorder %s74, %s75
    %p84 = scmp.eq.s32.totalorder %s17, 0
    %p85 = por %p83, %p84
    %p86 = scmp.ne.s32.totalorder %s74, %s75
    %p87 = scmp.eq.s32.totalorder %s18, 1
    %p88 = por %p86, %p87
    %p90 = scmp.ne.s32.totalorder %s75, %s89
    %p91 = scmp.eq.s32.totalorder %s18, 0
    %p92 = por %p90, %p91
    %s94 = sadd.s32 %s93, 1
    %p97 = scmp.eq.s32.totalorder %s12, 1
    %p98 = scmp.ne.s32.totalorder %s93, %s95
    %p99 = scmp.eq.s32.totalorder %s12, 0
    %p100 = por %p98, %p99
    %p101 = scmp.ne.s32.totalorder %s93, %s95
    %p102 = scmp.eq.s32.totalorder %s17, 1
    %p103 = por %p101, %p102
    %p104 = scmp.ne.s32.totalorder %s95, %s96
    %p105 = scmp.eq.s32.totalorder %s17, 0
    %p106 = por %p104, %p105
    %p107 = scmp.ne.s32.totalorder %s95, %s96
    %p108 = scmp.eq.s32.totalorder %s18, 1
    %p109 = por %p107, %p108
    %p111 = scmp.ne.s32.totalorder %s96, %s110
    %p112 = scmp.eq.s32.totalorder %s18, 0
    %p113 = por %p111, %p112
    %s115 = sadd.s32 %s114, 1
    %p118 = scmp.eq.s32.totalorder %s12, 1
    %p119 = scmp.ne.s32.totalorder %s114, %s116
    %p120 = scmp.eq.s32.totalorder %s12, 0
    %p121 = por %p119, %p120
    %p122 = scmp.ne.s32.totalorder %s114, %s116
    %p123 = scmp.eq.s32.totalorder %s17, 1
    %p124 = por %p122, %p123
    %p125 = scmp.ne.s32.totalorder %s116, %s117
    %p126 = scmp.eq.s32.totalorder %s17, 0
    %p127 = por %p125, %p126
    %p128 = scmp.ne.s32.totalorder %s116, %s117
    %p129 = scmp.eq.s32.totalorder %s18, 1
    %p130 = por %p128, %p129
    %p132 = scmp.ne.s32.totalorder %s117, %s131
    %p133 = scmp.eq.s32.totalorder %s18, 0
    %p134 = por %p132, %p133
    %s136 = sadd.s32 %s135, 1
    %p139 = scmp.eq.s32.totalorder %s12, 1
    %p140 = scmp.ne.s32.totalorder %s135, %s137
    %p141 = scmp.eq.s32.totalorder %s12, 0
    %p142 = por %p140, %p141
    %p143 = scmp.ne.s32.totalorder %s135, %s137
    %p144 = scmp.eq.s32.totalorder %s17, 1
    %p145 = por %p143, %p144
    %p146 = scmp.ne.s32.totalorder %s137, %s138
    %p147 = scmp.eq.s32.totalorder %s17, 0
    %p148 = por %p146, %p147
    %p149 = scmp.ne.s32.totalorder %s137, %s138
    %p150 = scmp.eq.s32.totalorder %s18, 1
    %p151 = por %p149, %p150
    %p153 = scmp.ne.s32.totalorder %s138, %s152
    %p154 = scmp.eq.s32.totalorder %s18, 0
    %p155 = por %p153, %p154
    %s156 = ssub.s32 %s12, %s19
    %p157 = scmp.eq.s32.totalorder %s156, 0
    %s159 = sadd.s32 %s158, 1
    %s160 = scalar_select %p157, %s158, %s159
    %p163 = pneg %p157
    %p164 = scmp.eq.s32.totalorder %s12, 1
    %p165 = por %p163, %p164
    %p166 = scmp.ne.s32.totalorder %s158, %s161
    %p167 = scmp.eq.s32.totalorder %s12, 0
    %p168 = por %p166, %p167
    %p169 = scmp.ne.s32.totalorder %s158, %s161
    %p170 = scmp.eq.s32.totalorder %s17, 1
    %p171 = por %p169, %p170
    %p172 = scmp.ne.s32.totalorder %s161, %s162
    %p173 = scmp.eq.s32.totalorder %s17, 0
    %p174 = por %p172, %p173
    %p175 = scmp.ne.s32.totalorder %s161, %s162
    %p176 = scmp.eq.s32.totalorder %s18, 1
    %p177 = por %p175, %p176
    %p179 = scmp.ne.s32.totalorder %s162, %s178
    %p180 = scmp.eq.s32.totalorder %s18, 0
    %p181 = por %p179, %p180
    %p182 = scmp.le.s32.totalorder 1, %s12
    %p183 = scmp.lt.s32.totalorder %s12, 3
    %p184 = pnand %p182, %p183
    %p185 = pneg %p184
    // Predicated region
    $region9: #{stage2_generator_forward.1} parent=5 // pred_check
      _
    $region10: #{stage2_generator_forward.1} parent=5 // pred_check_branch
      %187 = sbr.rel (%p184) target = $region12
    $region11: #{stage2_generator_forward.1} parent=5 // pred_region
      %s188 = ssub.s32 %s12, 1
      // Predicated region
      $region13: #{stage2_generator_forward.1} parent=11 // pred_check
        %p189 = pneg %p85
      $region14: #{stage2_generator_forward.1} parent=11 // pred_check_branch
        %191 = sbr.rel (%p189) target = $region16
      $region15: #{stage2_generator_forward.1} parent=11 // pred_region
        _
      $region16: #{stage2_generator_forward.1} parent=11 // pred_fallthru
        _
      // Predicated region
      $region17: #{stage2_generator_forward.1} parent=11 // pred_check
        %p192 = pneg %p106
      $region18: #{stage2_generator_forward.1} parent=11 // pred_check_branch
        %194 = sbr.rel (%p192) target = $region20
      $region19: #{stage2_generator_forward.1} parent=11 // pred_region
        _
      $region20: #{stage2_generator_forward.1} parent=11 // pred_fallthru
        _
      // Predicated region
      $region21: #{stage2_generator_forward.1} parent=11 // pred_check
        %p195 = pneg %p127
      $region22: #{stage2_generator_forward.1} parent=11 // pred_check_branch
        %197 = sbr.rel (%p195) target = $region24
      $region23: #{stage2_generator_forward.1} parent=11 // pred_region
        _
      $region24: #{stage2_generator_forward.1} parent=11 // pred_fallthru
        _
      // Predicated region
      $region25: #{stage2_generator_forward.1} parent=11 // pred_check
        %p198 = pneg %p148
      $region26: #{stage2_generator_forward.1} parent=11 // pred_check_branch
        %200 = sbr.rel (%p198) target = $region28
      $region27: #{stage2_generator_forward.1} parent=11 // pred_region
        _
      $region28: #{stage2_generator_forward.1} parent=11 // pred_fallthru
        _
    $region12: #{stage2_generator_forward.1} parent=5 // pred_fallthru
      _
    %p201 = scmp.lt.s32.totalorder %s12, 2
    // Predicated region
    $region29: #{stage2_generator_forward.1} parent=5 // pred_check
      %p202 = pneg %p201
    $region30: #{stage2_generator_forward.1} parent=5 // pred_check_branch
      %204 = sbr.rel (%p202) target = $region32
    $region31: #{stage2_generator_forward.1} parent=5 // pred_region
      // Predicated region
      $region33: #{stage2_generator_forward.1} parent=31 // pred_check
        %p205 = pneg %p32
      $region34: #{stage2_generator_forward.1} parent=31 // pred_check_branch
        %207 = sbr.rel (%p205) target = $region36
      $region35: #{stage2_generator_forward.1} parent=31 // pred_region
        %p208 = scmp.lt.s32.totalorder %s12, 1
        %s209 = scalar_select %p208, %s12, 1
        %s210 = smul.addr %s209, 32
        %s211 = smul.addr %s210, 4
        %s212 = scalar_lea.vmem %s0, %s211
      $region36: #{stage2_generator_forward.1} parent=31 // pred_fallthru
        _
      // Predicated region
      $region37: #{stage2_generator_forward.1} parent=31 // pred_check
        %p213 = pneg %p58
      $region38: #{stage2_generator_forward.1} parent=31 // pred_check_branch
        %215 = sbr.rel (%p213) target = $region40
      $region39: #{stage2_generator_forward.1} parent=31 // pred_region
        %p216 = scmp.lt.s32.totalorder %s12, 1
        %s217 = scalar_select %p216, %s12, 1
        %s218 = scalar_lea.vmem %s1, %s217
      $region40: #{stage2_generator_forward.1} parent=31 // pred_fallthru
        _
    $region32: #{stage2_generator_forward.1} parent=5 // pred_fallthru
      _
    %p219 = scmp.le.s32.totalorder 1, %s12
    %p220 = scmp.lt.s32.totalorder %s12, 3
    %p221 = pnand %p219, %p220
    %p222 = pneg %p221
    // Predicated region
    $region41: #{stage2_generator_forward.1} parent=5 // pred_check
      _
    $region42: #{stage2_generator_forward.1} parent=5 // pred_check_branch
      %224 = sbr.rel (%p221) target = $region44
    $region43: #{stage2_generator_forward.1} parent=5 // pred_region
      %s225 = ssub.s32 %s12, 1
      %p226 = scmp.lt.s32.totalorder %s17, 1
      %s227 = scalar_select %p226, %s17, 1
      %s228 = smul.addr %s227, 32
      %s229 = smul.addr %s228, 4
      %s230 = scalar_lea.vmem %s0, %s229
      %p231 = pneg %p38
      %p232 = pneg %p35
      %p233 = scmp.lt.s32.totalorder %s17, 1
      %s234 = scalar_select %p233, %s17, 1
      %s235 = scalar_lea.vmem %s1, %s234
      %p236 = pneg %p64
      %p237 = pneg %p61
      %p238 = pneg %p85
      %p239 = pneg %p82
      %p240 = pneg %p106
      %p241 = pneg %p103
      %p242 = pneg %p127
      %p243 = pneg %p124
      %p244 = pneg %p148
      %p245 = pneg %p145
      %p246 = pneg %p174
      %p247 = pneg %p171
      %p248 = scmp.lt.s32.totalorder %s17, 1
      %s249 = scalar_select %p248, %s17, 1
      %s250 = smul.addr %s249, 2
      %s251 = smul.addr %s250, 4
      %s252 = scalar_lea.vmem %s6, %s251
      %p253 = scmp.lt.s32.totalorder %s17, 1
      %s254 = scalar_select %p253, %s17, 1
      %s255 = smul.addr %s254, 32
      %s256 = smul.addr %s255, 4
      %s257 = scalar_lea.vmem %s0, %s256
      %p258 = scmp.lt.s32.totalorder %s17, 1
      %s259 = scalar_select %p258, %s17, 1
      %s260 = scalar_lea.vmem %s1, %s259
      %p261 = scmp.lt.s32.totalorder %s17, 1
      %s262 = scalar_select %p261, %s17, 1
      %s263 = smul.addr %s262, 2
      %s264 = smul.addr %s263, 4
      %s265 = scalar_lea.vmem %s6, %s264
      %v267 = vld [vmem:[%s257] sm:$0xf]
      %v268 = vld [vmem:[%s257 + $0x4] sm:$0xf]
      %v269 = vld [vmem:[%s257 + $0x8] sm:$0xf]
      %v270 = vld [vmem:[%s257 + $0xc] sm:$0xf]
      %v271 = vld [vmem:[%s257 + $0x10] sm:$0xf]
      %v272 = vld [vmem:[%s257 + $0x14] sm:$0xf]
      %v273 = vld [vmem:[%s257 + $0x18] sm:$0xf]
      %v274 = vld [vmem:[%s257 + $0x1c] sm:$0xf]
      %v275 = vld [vmem:[%s257 + $0x20] sm:$0xf]
      %v276 = vld [vmem:[%s257 + $0x24] sm:$0xf]
      %v277 = vld [vmem:[%s257 + $0x28] sm:$0xf]
      %v278 = vld [vmem:[%s257 + $0x2c] sm:$0xf]
      %v279 = vld [vmem:[%s257 + $0x30] sm:$0xf]
      %v280 = vld [vmem:[%s257 + $0x34] sm:$0xf]
      %v281 = vld [vmem:[%s257 + $0x38] sm:$0xf]
      %v282 = vld [vmem:[%s257 + $0x3c] sm:$0xf]
      %v283 = vld [vmem:[%s257 + $0x40] sm:$0xf]
      %v284 = vld [vmem:[%s257 + $0x44] sm:$0xf]
      %v285 = vld [vmem:[%s257 + $0x48] sm:$0xf]
      %v286 = vld [vmem:[%s257 + $0x4c] sm:$0xf]
      %v287 = vld [vmem:[%s257 + $0x50] sm:$0xf]
      %v288 = vld [vmem:[%s257 + $0x54] sm:$0xf]
      %v289 = vld [vmem:[%s257 + $0x58] sm:$0xf]
      %v290 = vld [vmem:[%s257 + $0x5c] sm:$0xf]
      %v291 = vld [vmem:[%s257 + $0x60] sm:$0xf]
      %v292 = vld [vmem:[%s257 + $0x64] sm:$0xf]
      %v293 = vld [vmem:[%s257 + $0x68] sm:$0xf]
      %v294 = vld [vmem:[%s257 + $0x6c] sm:$0xf]
      %v295 = vld [vmem:[%s257 + $0x70] sm:$0xf]
      %v296 = vld [vmem:[%s257 + $0x74] sm:$0xf]
      %v297 = vld [vmem:[%s257 + $0x78] sm:$0xf]
      %v298 = vld [vmem:[%s257 + $0x7c] sm:$0xf]
      %v299 = vld [vmem:[%s260] sm:$0x1]
      %v301 = vpack.i.b16 %v299, %v299
      %v303 = vlaneseq
      %v304 = vshrl.u32 %v303, 7
      %v305 = vsub.s32 0, %v304
      %v306 = vrot.slane %v301, %v305
      %v339 = vunpack.c.l.b16 %v267
      %v340 = vunpack.c.l.b16 %v268
      %v341 = vunpack.c.l.b16 %v269
      %v342 = vunpack.c.l.b16 %v270
      %v343 = vunpack.c.l.b16 %v271
      %v344 = vunpack.c.l.b16 %v272
      %v345 = vunpack.c.l.b16 %v273
      %v346 = vunpack.c.l.b16 %v274
      %v347 = vunpack.c.l.b16 %v275
      %v348 = vunpack.c.l.b16 %v276
      %v349 = vunpack.c.l.b16 %v277
      %v350 = vunpack.c.l.b16 %v278
      %v351 = vunpack.c.l.b16 %v279
      %v352 = vunpack.c.l.b16 %v280
      %v353 = vunpack.c.l.b16 %v281
      %v354 = vunpack.c.l.b16 %v282
      %v355 = vunpack.c.l.b16 %v283
      %v356 = vunpack.c.l.b16 %v284
      %v357 = vunpack.c.l.b16 %v285
      %v358 = vunpack.c.l.b16 %v286
      %v359 = vunpack.c.l.b16 %v287
      %v360 = vunpack.c.l.b16 %v288
      %v361 = vunpack.c.l.b16 %v289
      %v362 = vunpack.c.l.b16 %v290
      %v363 = vunpack.c.l.b16 %v291
      %v364 = vunpack.c.l.b16 %v292
      %v365 = vunpack.c.l.b16 %v293
      %v366 = vunpack.c.l.b16 %v294
      %v367 = vunpack.c.l.b16 %v295
      %v368 = vunpack.c.l.b16 %v296
      %v369 = vunpack.c.l.b16 %v297
      %v370 = vunpack.c.l.b16 %v298
      %v371 = vpack.c.b16 %v340, %v339
      %v372 = vpack.c.b16 %v342, %v341
      %v373 = vpack.c.b16 %v344, %v343
      %v374 = vpack.c.b16 %v346, %v345
      %v375 = vpack.c.b16 %v348, %v347
      %v376 = vpack.c.b16 %v350, %v349
      %v377 = vpack.c.b16 %v352, %v351
      %v378 = vpack.c.b16 %v354, %v353
      %v379 = vpack.c.b16 %v356, %v355
      %v380 = vpack.c.b16 %v358, %v357
      %v381 = vpack.c.b16 %v360, %v359
      %v382 = vpack.c.b16 %v362, %v361
      %v383 = vpack.c.b16 %v364, %v363
      %v384 = vpack.c.b16 %v366, %v365
      %v385 = vpack.c.b16 %v368, %v367
      %v386 = vpack.c.b16 %v370, %v369
      %388 = vrot.lane.b32.xlu0 %v306, 4
      %v389 = vpop.permute.xlu0 %388
      %vm390 = vcmask 31744
      %v393 = vsel %vm390, %v371, %v389
      %v396 = vsel %vm390, %v372, %v389
      %v399 = vsel %vm390, %v373, %v389
      %v402 = vsel %vm390, %v374, %v389
      %v405 = vsel %vm390, %v375, %v389
      %v408 = vsel %vm390, %v376, %v389
      %v411 = vsel %vm390, %v377, %v389
      %v414 = vsel %vm390, %v378, %v389
      %v417 = vsel %vm390, %v379, %v389
      %v420 = vsel %vm390, %v380, %v389
      %v423 = vsel %vm390, %v381, %v389
      %v426 = vsel %vm390, %v382, %v389
      %v429 = vsel %vm390, %v383, %v389
      %v432 = vsel %vm390, %v384, %v389
      %v435 = vsel %vm390, %v385, %v389
      %v438 = vsel %vm390, %v386, %v389
      %v440 = vunpack.c.l.bf16 %v393
      %v441 = vunpack.c.h.bf16 %v393
      %v442 = vunpack.c.l.bf16 %v396
      %v443 = vunpack.c.h.bf16 %v396
      %v444 = vunpack.c.l.bf16 %v399
      %v445 = vunpack.c.h.bf16 %v399
      %v446 = vunpack.c.l.bf16 %v402
      %v447 = vunpack.c.h.bf16 %v402
      %v448 = vunpack.c.l.bf16 %v405
      %v449 = vunpack.c.h.bf16 %v405
      %v450 = vunpack.c.l.bf16 %v408
      %v451 = vunpack.c.h.bf16 %v408
      %v452 = vunpack.c.l.bf16 %v411
      %v453 = vunpack.c.h.bf16 %v411
      %v454 = vunpack.c.l.bf16 %v414
      %v455 = vunpack.c.h.bf16 %v414
      %v456 = vunpack.c.l.bf16 %v417
      %v457 = vunpack.c.h.bf16 %v417
      %v458 = vunpack.c.l.bf16 %v420
      %v459 = vunpack.c.h.bf16 %v420
      %v460 = vunpack.c.l.bf16 %v423
      %v461 = vunpack.c.h.bf16 %v423
      %v462 = vunpack.c.l.bf16 %v426
      %v463 = vunpack.c.h.bf16 %v426
      %v464 = vunpack.c.l.bf16 %v429
      %v465 = vunpack.c.h.bf16 %v429
      %v466 = vunpack.c.l.bf16 %v432
      %v467 = vunpack.c.h.bf16 %v432
      %v468 = vunpack.c.l.bf16 %v435
      %v469 = vunpack.c.h.bf16 %v435
      %v470 = vunpack.c.l.bf16 %v438
      %v471 = vunpack.c.h.bf16 %v438
      %s472 = scalar_lea.vmem [#allocation2], 24
      %vm473 = vcmask 97280
      %474 = vst.msk [vmem:[%s472 + $0x1] sm:$0xff] %vm473, %v440
      %475 = vst.msk [vmem:[%s472 + $0x9] sm:$0xff] %vm473, %v441
      %476 = vst.msk [vmem:[%s472 + $0x19] sm:$0xff] %vm473, %v442
      %477 = vst.msk [vmem:[%s472 + $0x21] sm:$0xff] %vm473, %v443
      %478 = vst.msk [vmem:[%s472 + $0x31] sm:$0xff] %vm473, %v444
      %479 = vst.msk [vmem:[%s472 + $0x39] sm:$0xff] %vm473, %v445
      %480 = vst.msk [vmem:[%s472 + $0x49] sm:$0xff] %vm473, %v446
      %481 = vst.msk [vmem:[%s472 + $0x51] sm:$0xff] %vm473, %v447
      %482 = vst.msk [vmem:[%s472 + $0x61] sm:$0xff] %vm473, %v448
      %483 = vst.msk [vmem:[%s472 + $0x69] sm:$0xff] %vm473, %v449
      %484 = vst.msk [vmem:[%s472 + $0x79] sm:$0xff] %vm473, %v450
      %485 = vst.msk [vmem:[%s472 + $0x81] sm:$0xff] %vm473, %v451
      %486 = vst.msk [vmem:[%s472 + $0x91] sm:$0xff] %vm473, %v452
      %487 = vst.msk [vmem:[%s472 + $0x99] sm:$0xff] %vm473, %v453
      %488 = vst.msk [vmem:[%s472 + $0xa9] sm:$0xff] %vm473, %v454
      %489 = vst.msk [vmem:[%s472 + $0xb1] sm:$0xff] %vm473, %v455
      %490 = vst.msk [vmem:[%s472 + $0xc1] sm:$0xff] %vm473, %v456
      %491 = vst.msk [vmem:[%s472 + $0xc9] sm:$0xff] %vm473, %v457
      %492 = vst.msk [vmem:[%s472 + $0xd9] sm:$0xff] %vm473, %v458
      %493 = vst.msk [vmem:[%s472 + $0xe1] sm:$0xff] %vm473, %v459
      %494 = vst.msk [vmem:[%s472 + $0xf1] sm:$0xff] %vm473, %v460
      %495 = vst.msk [vmem:[%s472 + $0xf9] sm:$0xff] %vm473, %v461
      %496 = vst.msk [vmem:[%s472 + $0x109] sm:$0xff] %vm473, %v462
      %497 = vst.msk [vmem:[%s472 + $0x111] sm:$0xff] %vm473, %v463
      %498 = vst.msk [vmem:[%s472 + $0x121] sm:$0xff] %vm473, %v464
      %499 = vst.msk [vmem:[%s472 + $0x129] sm:$0xff] %vm473, %v465
      %500 = vst.msk [vmem:[%s472 + $0x139] sm:$0xff] %vm473, %v466
      %501 = vst.msk [vmem:[%s472 + $0x141] sm:$0xff] %vm473, %v467
      %502 = vst.msk [vmem:[%s472 + $0x151] sm:$0xff] %vm473, %v468
      %503 = vst.msk [vmem:[%s472 + $0x159] sm:$0xff] %vm473, %v469
      %504 = vst.msk [vmem:[%s472 + $0x169] sm:$0xff] %vm473, %v470
      %505 = vst.msk [vmem:[%s472 + $0x171] sm:$0xff] %vm473, %v471
      %506 = vst.msk [vmem:[#allocation2] sm:$0xff] %vm473, 0.0
      %507 = vst.msk [vmem:[#allocation2 + $0x8] sm:$0xff] %vm473, 0.0
      %vm508 = vcmask 91136
      %509 = vst.msk [vmem:[#allocation2 + $0x10] sm:$0x3] %vm508, 0.0
      %s510 = scalar_lea.vmem [#allocation2], 408
      %511 = vst.msk [vmem:[%s510] sm:$0xff] %vm473, 0.0
      %512 = vst.msk [vmem:[%s510 + $0x8] sm:$0xff] %vm473, 0.0
      %513 = vst.msk [vmem:[%s510 + $0x10] sm:$0x3] %vm508, 0.0
      %vm514 = vcmask 90112
      %515 = vst.msk [vmem:[#allocation2] sm:$0x1] %vm514, 0.0
      %516 = vst.msk [vmem:[#allocation2 + $0x18] sm:$0x1] %vm514, 0.0
      %517 = vst.msk [vmem:[#allocation2 + $0x30] sm:$0x1] %vm514, 0.0
      %518 = vst.msk [vmem:[#allocation2 + $0x48] sm:$0x1] %vm514, 0.0
      %519 = vst.msk [vmem:[#allocation2 + $0x60] sm:$0x1] %vm514, 0.0
      %520 = vst.msk [vmem:[#allocation2 + $0x78] sm:$0x1] %vm514, 0.0
      %521 = vst.msk [vmem:[#allocation2 + $0x90] sm:$0x1] %vm514, 0.0
      %522 = vst.msk [vmem:[#allocation2 + $0xa8] sm:$0x1] %vm514, 0.0
      %523 = vst.msk [vmem:[#allocation2 + $0xc0] sm:$0x1] %vm514, 0.0
      %524 = vst.msk [vmem:[#allocation2 + $0xd8] sm:$0x1] %vm514, 0.0
      %525 = vst.msk [vmem:[#allocation2 + $0xf0] sm:$0x1] %vm514, 0.0
      %526 = vst.msk [vmem:[#allocation2 + $0x108] sm:$0x1] %vm514, 0.0
      %527 = vst.msk [vmem:[#allocation2 + $0x120] sm:$0x1] %vm514, 0.0
      %528 = vst.msk [vmem:[#allocation2 + $0x138] sm:$0x1] %vm514, 0.0
      %529 = vst.msk [vmem:[#allocation2 + $0x150] sm:$0x1] %vm514, 0.0
      %530 = vst.msk [vmem:[#allocation2 + $0x168] sm:$0x1] %vm514, 0.0
      %531 = vst.msk [vmem:[#allocation2 + $0x180] sm:$0x1] %vm514, 0.0
      %532 = vst.msk [vmem:[#allocation2 + $0x198] sm:$0x1] %vm514, 0.0
      %533 = vst.msk [vmem:[#allocation2 + $0x11] sm:$0x1] %vm514, 0.0
      %534 = vst.msk [vmem:[#allocation2 + $0x29] sm:$0x1] %vm514, 0.0
      %535 = vst.msk [vmem:[#allocation2 + $0x41] sm:$0x1] %vm514, 0.0
      %536 = vst.msk [vmem:[#allocation2 + $0x59] sm:$0x1] %vm514, 0.0
      %537 = vst.msk [vmem:[#allocation2 + $0x71] sm:$0x1] %vm514, 0.0
      %538 = vst.msk [vmem:[#allocation2 + $0x89] sm:$0x1] %vm514, 0.0
      %539 = vst.msk [vmem:[#allocation2 + $0xa1] sm:$0x1] %vm514, 0.0
      %540 = vst.msk [vmem:[#allocation2 + $0xb9] sm:$0x1] %vm514, 0.0
      %541 = vst.msk [vmem:[#allocation2 + $0xd1] sm:$0x1] %vm514, 0.0
      %542 = vst.msk [vmem:[#allocation2 + $0xe9] sm:$0x1] %vm514, 0.0
      %543 = vst.msk [vmem:[#allocation2 + $0x101] sm:$0x1] %vm514, 0.0
      %544 = vst.msk [vmem:[#allocation2 + $0x119] sm:$0x1] %vm514, 0.0
      %545 = vst.msk [vmem:[#allocation2 + $0x131] sm:$0x1] %vm514, 0.0
      %546 = vst.msk [vmem:[#allocation2 + $0x149] sm:$0x1] %vm514, 0.0
      %547 = vst.msk [vmem:[#allocation2 + $0x161] sm:$0x1] %vm514, 0.0
      %548 = vst.msk [vmem:[#allocation2 + $0x179] sm:$0x1] %vm514, 0.0
      %549 = vst.msk [vmem:[#allocation2 + $0x191] sm:$0x1] %vm514, 0.0
      %550 = vst.msk [vmem:[#allocation2 + $0x1a9] sm:$0x1] %vm514, 0.0
      %v551 = vld [vmem:[#allocation2] sm:$0xff]
      %v552 = vld [vmem:[#allocation2 + $0x8] sm:$0xff]
      %v553 = vld [vmem:[#allocation2 + $0x10] sm:$0x3]
      %v554 = vld [vmem:[#allocation2 + $0x18] sm:$0xff]
      %v555 = vld [vmem:[#allocation2 + $0x20] sm:$0xff]
      %v556 = vld [vmem:[#allocation2 + $0x28] sm:$0x3]
      %v557 = vld [vmem:[#allocation2 + $0x30] sm:$0xff]
      %v558 = vld [vmem:[#allocation2 + $0x38] sm:$0xff]
      %v559 = vld [vmem:[#allocation2 + $0x40] sm:$0x3]
      %v560 = vld [vmem:[#allocation2 + $0x48] sm:$0xff]
      %v561 = vld [vmem:[#allocation2 + $0x50] sm:$0xff]
      %v562 = vld [vmem:[#allocation2 + $0x58] sm:$0x3]
      %v563 = vld [vmem:[#allocation2 + $0x60] sm:$0xff]
      %v564 = vld [vmem:[#allocation2 + $0x68] sm:$0xff]
      %v565 = vld [vmem:[#allocation2 + $0x70] sm:$0x3]
      %v566 = vld [vmem:[#allocation2 + $0x78] sm:$0xff]
      %v567 = vld [vmem:[#allocation2 + $0x80] sm:$0xff]
      %v568 = vld [vmem:[#allocation2 + $0x88] sm:$0x3]
      %v569 = vld [vmem:[#allocation2 + $0x90] sm:$0xff]
      %v570 = vld [vmem:[#allocation2 + $0x98] sm:$0xff]
      %v571 = vld [vmem:[#allocation2 + $0xa0] sm:$0x3]
      %v572 = vld [vmem:[#allocation2 + $0xa8] sm:$0xff]
      %v573 = vld [vmem:[#allocation2 + $0xb0] sm:$0xff]
      %v574 = vld [vmem:[#allocation2 + $0xb8] sm:$0x3]
      %v575 = vld [vmem:[#allocation2 + $0xc0] sm:$0xff]
      %v576 = vld [vmem:[#allocation2 + $0xc8] sm:$0xff]
      %v577 = vld [vmem:[#allocation2 + $0xd0] sm:$0x3]
      %v578 = vld [vmem:[#allocation2 + $0xd8] sm:$0xff]
      %v579 = vld [vmem:[#allocation2 + $0xe0] sm:$0xff]
      %v580 = vld [vmem:[#allocation2 + $0xe8] sm:$0x3]
      %v581 = vld [vmem:[#allocation2 + $0xf0] sm:$0xff]
      %v582 = vld [vmem:[#allocation2 + $0xf8] sm:$0xff]
      %v583 = vld [vmem:[#allocation2 + $0x100] sm:$0x3]
      %v584 = vld [vmem:[#allocation2 + $0x108] sm:$0xff]
      %v585 = vld [vmem:[#allocation2 + $0x110] sm:$0xff]
      %v586 = vld [vmem:[#allocation2 + $0x118] sm:$0x3]
      %v587 = vld [vmem:[#allocation2 + $0x120] sm:$0xff]
      %v588 = vld [vmem:[#allocation2 + $0x128] sm:$0xff]
      %v589 = vld [vmem:[#allocation2 + $0x130] sm:$0x3]
      %v590 = vld [vmem:[#allocation2 + $0x138] sm:$0xff]
      %v591 = vld [vmem:[#allocation2 + $0x140] sm:$0xff]
      %v592 = vld [vmem:[#allocation2 + $0x148] sm:$0x3]
      %v593 = vld [vmem:[#allocation2 + $0x150] sm:$0xff]
      %v594 = vld [vmem:[#allocation2 + $0x158] sm:$0xff]
      %v595 = vld [vmem:[#allocation2 + $0x160] sm:$0x3]
      %v596 = vld [vmem:[#allocation2 + $0x168] sm:$0xff]
      %v597 = vld [vmem:[#allocation2 + $0x170] sm:$0xff]
      %v598 = vld [vmem:[#allocation2 + $0x178] sm:$0x3]
      %v599 = vld [vmem:[#allocation2 + $0x180] sm:$0xff]
      %v600 = vld [vmem:[#allocation2 + $0x188] sm:$0xff]
      %v601 = vld [vmem:[#allocation2 + $0x190] sm:$0x3]
      %v602 = vld [vmem:[#allocation2 + $0x198] sm:$0xff]
      %v603 = vld [vmem:[#allocation2 + $0x1a0] sm:$0xff]
      %v604 = vld [vmem:[#allocation2 + $0x1a8] sm:$0x3]
      %vm653 = vcmask 1046528
      %v654 = vrot.slane %v551, 1
      %v655 = vrot.slane %v552, 1
      %v656 = vsel %vm653, %v654, %v655
      %v657 = vrot.slane %v553, 1
      %v658 = vsel %vm653, %v655, %v657
      %v659 = vrot.slane %v554, 1
      %v660 = vrot.slane %v555, 1
      %v661 = vsel %vm653, %v659, %v660
      %v662 = vrot.slane %v556, 1
      %v663 = vsel %vm653, %v660, %v662
      %v664 = vrot.slane %v557, 1
      %v665 = vrot.slane %v558, 1
      %v666 = vsel %vm653, %v664, %v665
      %v667 = vrot.slane %v559, 1
      %v668 = vsel %vm653, %v665, %v667
      %v669 = vrot.slane %v560, 1
      %v670 = vrot.slane %v561, 1
      %v671 = vsel %vm653, %v669, %v670
      %v672 = vrot.slane %v562, 1
      %v673 = vsel %vm653, %v670, %v672
      %v674 = vrot.slane %v563, 1
      %v675 = vrot.slane %v564, 1
      %v676 = vsel %vm653, %v674, %v675
      %v677 = vrot.slane %v565, 1
      %v678 = vsel %vm653, %v675, %v677
      %v679 = vrot.slane %v566, 1
      %v680 = vrot.slane %v567, 1
      %v681 = vsel %vm653, %v679, %v680
      %v682 = vrot.slane %v568, 1
      %v683 = vsel %vm653, %v680, %v682
      %v684 = vrot.slane %v569, 1
      %v685 = vrot.slane %v570, 1
      %v686 = vsel %vm653, %v684, %v685
      %v687 = vrot.slane %v571, 1
      %v688 = vsel %vm653, %v685, %v687
      %v689 = vrot.slane %v572, 1
      %v690 = vrot.slane %v573, 1
      %v691 = vsel %vm653, %v689, %v690
      %v692 = vrot.slane %v574, 1
      %v693 = vsel %vm653, %v690, %v692
      %v694 = vrot.slane %v575, 1
      %v695 = vrot.slane %v576, 1
      %v696 = vsel %vm653, %v694, %v695
      %v697 = vrot.slane %v577, 1
      %v698 = vsel %vm653, %v695, %v697
      %v699 = vrot.slane %v578, 1
      %v700 = vrot.slane %v579, 1
      %v701 = vsel %vm653, %v699, %v700
      %v702 = vrot.slane %v580, 1
      %v703 = vsel %vm653, %v700, %v702
      %v704 = vrot.slane %v581, 1
      %v705 = vrot.slane %v582, 1
      %v706 = vsel %vm653, %v704, %v705
      %v707 = vrot.slane %v583, 1
      %v708 = vsel %vm653, %v705, %v707
      %v709 = vrot.slane %v584, 1
      %v710 = vrot.slane %v585, 1
      %v711 = vsel %vm653, %v709, %v710
      %v712 = vrot.slane %v586, 1
      %v713 = vsel %vm653, %v710, %v712
      %v714 = vrot.slane %v587, 1
      %v715 = vrot.slane %v588, 1
      %v716 = vsel %vm653, %v714, %v715
      %v717 = vrot.slane %v589, 1
      %v718 = vsel %vm653, %v715, %v717
      %v719 = vrot.slane %v590, 1
      %v720 = vrot.slane %v591, 1
      %v721 = vsel %vm653, %v719, %v720
      %v722 = vrot.slane %v592, 1
      %v723 = vsel %vm653, %v720, %v722
      %v724 = vrot.slane %v593, 1
      %v725 = vrot.slane %v594, 1
      %v726 = vsel %vm653, %v724, %v725
      %v727 = vrot.slane %v595, 1
      %v728 = vsel %vm653, %v725, %v727
      %v729 = vrot.slane %v596, 1
      %v730 = vrot.slane %v597, 1
      %v731 = vsel %vm653, %v729, %v730
      %v732 = vrot.slane %v598, 1
      %v733 = vsel %vm653, %v730, %v732
      %vm734 = vcmask 1045504
      %v735 = vrot.slane %v551, 2
      %v736 = vrot.slane %v552, 2
      %v737 = vsel %vm734, %v735, %v736
      %v738 = vrot.slane %v553, 2
      %v739 = vsel %vm734, %v736, %v738
      %v740 = vrot.slane %v554, 2
      %v741 = vrot.slane %v555, 2
      %v742 = vsel %vm734, %v740, %v741
      %v743 = vrot.slane %v556, 2
      %v744 = vsel %vm734, %v741, %v743
      %v745 = vrot.slane %v557, 2
      %v746 = vrot.slane %v558, 2
      %v747 = vsel %vm734, %v745, %v746
      %v748 = vrot.slane %v559, 2
      %v749 = vsel %vm734, %v746, %v748
      %v750 = vrot.slane %v560, 2
      %v751 = vrot.slane %v561, 2
      %v752 = vsel %vm734, %v750, %v751
      %v753 = vrot.slane %v562, 2
      %v754 = vsel %vm734, %v751, %v753
      %v755 = vrot.slane %v563, 2
      %v756 = vrot.slane %v564, 2
      %v757 = vsel %vm734, %v755, %v756
      %v758 = vrot.slane %v565, 2
      %v759 = vsel %vm734, %v756, %v758
      %v760 = vrot.slane %v566, 2
      %v761 = vrot.slane %v567, 2
      %v762 = vsel %vm734, %v760, %v761
      %v763 = vrot.slane %v568, 2
      %v764 = vsel %vm734, %v761, %v763
      %v765 = vrot.slane %v569, 2
      %v766 = vrot.slane %v570, 2
      %v767 = vsel %vm734, %v765, %v766
      %v768 = vrot.slane %v571, 2
      %v769 = vsel %vm734, %v766, %v768
      %v770 = vrot.slane %v572, 2
      %v771 = vrot.slane %v573, 2
      %v772 = vsel %vm734, %v770, %v771
      %v773 = vrot.slane %v574, 2
      %v774 = vsel %vm734, %v771, %v773
      %v775 = vrot.slane %v575, 2
      %v776 = vrot.slane %v576, 2
      %v777 = vsel %vm734, %v775, %v776
      %v778 = vrot.slane %v577, 2
      %v779 = vsel %vm734, %v776, %v778
      %v780 = vrot.slane %v578, 2
      %v781 = vrot.slane %v579, 2
      %v782 = vsel %vm734, %v780, %v781
      %v783 = vrot.slane %v580, 2
      %v784 = vsel %vm734, %v781, %v783
      %v785 = vrot.slane %v581, 2
      %v786 = vrot.slane %v582, 2
      %v787 = vsel %vm734, %v785, %v786
      %v788 = vrot.slane %v583, 2
      %v789 = vsel %vm734, %v786, %v788
      %v790 = vrot.slane %v584, 2
      %v791 = vrot.slane %v585, 2
      %v792 = vsel %vm734, %v790, %v791
      %v793 = vrot.slane %v586, 2
      %v794 = vsel %vm734, %v791, %v793
      %v795 = vrot.slane %v587, 2
      %v796 = vrot.slane %v588, 2
      %v797 = vsel %vm734, %v795, %v796
      %v798 = vrot.slane %v589, 2
      %v799 = vsel %vm734, %v796, %v798
      %v800 = vrot.slane %v590, 2
      %v801 = vrot.slane %v591, 2
      %v802 = vsel %vm734, %v800, %v801
      %v803 = vrot.slane %v592, 2
      %v804 = vsel %vm734, %v801, %v803
      %v805 = vrot.slane %v593, 2
      %v806 = vrot.slane %v594, 2
      %v807 = vsel %vm734, %v805, %v806
      %v808 = vrot.slane %v595, 2
      %v809 = vsel %vm734, %v806, %v808
      %v810 = vrot.slane %v596, 2
      %v811 = vrot.slane %v597, 2
      %v812 = vsel %vm734, %v810, %v811
      %v813 = vrot.slane %v598, 2
      %v814 = vsel %vm734, %v811, %v813
      %v818 = vrot.slane %v599, 1
      %v819 = vrot.slane %v600, 1
      %v820 = vsel %vm653, %v818, %v819
      %v821 = vrot.slane %v601, 1
      %v822 = vsel %vm653, %v819, %v821
      %v823 = vrot.slane %v599, 2
      %v824 = vrot.slane %v600, 2
      %v825 = vsel %vm734, %v823, %v824
      %v826 = vrot.slane %v601, 2
      %v827 = vsel %vm734, %v824, %v826
      %v831 = vrot.slane %v602, 1
      %v832 = vrot.slane %v603, 1
      %v833 = vsel %vm653, %v831, %v832
      %v834 = vrot.slane %v604, 1
      %v835 = vsel %vm653, %v832, %v834
      %v836 = vrot.slane %v602, 2
      %v837 = vrot.slane %v603, 2
      %v838 = vsel %vm734, %v836, %v837
      %v839 = vrot.slane %v604, 2
      %v840 = vsel %vm734, %v837, %v839
      %841 = vrot.lane.b32.xlu0 %v656, 12
      %v842 = vpop.permute.xlu0 %841
      %843 = vrot.lane.b32.xlu0 %v658, 12
      %v844 = vpop.permute.xlu0 %843
      %845 = vrot.lane.b32.xlu0 %v661, 12
      %v846 = vpop.permute.xlu0 %845
      %847 = vrot.lane.b32.xlu0 %v663, 12
      %v848 = vpop.permute.xlu0 %847
      %849 = vrot.lane.b32.xlu0 %v666, 12
      %v850 = vpop.permute.xlu0 %849
      %851 = vrot.lane.b32.xlu0 %v668, 12
      %v852 = vpop.permute.xlu0 %851
      %853 = vrot.lane.b32.xlu0 %v671, 12
      %v854 = vpop.permute.xlu0 %853
      %855 = vrot.lane.b32.xlu0 %v673, 12
      %v856 = vpop.permute.xlu0 %855
      %857 = vrot.lane.b32.xlu0 %v676, 12
      %v858 = vpop.permute.xlu0 %857
      %859 = vrot.lane.b32.xlu0 %v678, 12
      %v860 = vpop.permute.xlu0 %859
      %861 = vrot.lane.b32.xlu0 %v681, 12
      %v862 = vpop.permute.xlu0 %861
      %863 = vrot.lane.b32.xlu0 %v683, 12
      %v864 = vpop.permute.xlu0 %863
      %865 = vrot.lane.b32.xlu0 %v686, 12
      %v866 = vpop.permute.xlu0 %865
      %867 = vrot.lane.b32.xlu0 %v688, 12
      %v868 = vpop.permute.xlu0 %867
      %869 = vrot.lane.b32.xlu0 %v691, 12
      %v870 = vpop.permute.xlu0 %869
      %871 = vrot.lane.b32.xlu0 %v693, 12
      %v872 = vpop.permute.xlu0 %871
      %873 = vrot.lane.b32.xlu0 %v696, 12
      %v874 = vpop.permute.xlu0 %873
      %875 = vrot.lane.b32.xlu0 %v698, 12
      %v876 = vpop.permute.xlu0 %875
      %877 = vrot.lane.b32.xlu0 %v701, 12
      %v878 = vpop.permute.xlu0 %877
      %879 = vrot.lane.b32.xlu0 %v703, 12
      %v880 = vpop.permute.xlu0 %879
      %881 = vrot.lane.b32.xlu0 %v706, 12
      %v882 = vpop.permute.xlu0 %881
      %883 = vrot.lane.b32.xlu0 %v708, 12
      %v884 = vpop.permute.xlu0 %883
      %885 = vrot.lane.b32.xlu0 %v711, 12
      %v886 = vpop.permute.xlu0 %885
      %887 = vrot.lane.b32.xlu0 %v713, 12
      %v888 = vpop.permute.xlu0 %887
      %889 = vrot.lane.b32.xlu0 %v716, 12
      %v890 = vpop.permute.xlu0 %889
      %891 = vrot.lane.b32.xlu0 %v718, 12
      %v892 = vpop.permute.xlu0 %891
      %893 = vrot.lane.b32.xlu0 %v721, 12
      %v894 = vpop.permute.xlu0 %893
      %895 = vrot.lane.b32.xlu0 %v723, 12
      %v896 = vpop.permute.xlu0 %895
      %897 = vrot.lane.b32.xlu0 %v726, 12
      %v898 = vpop.permute.xlu0 %897
      %899 = vrot.lane.b32.xlu0 %v728, 12
      %v900 = vpop.permute.xlu0 %899
      %901 = vrot.lane.b32.xlu0 %v731, 12
      %v902 = vpop.permute.xlu0 %901
      %903 = vrot.lane.b32.xlu0 %v733, 12
      %v904 = vpop.permute.xlu0 %903
      %937 = vrot.lane.b32.xlu0 %v737, 24
      %v938 = vpop.permute.xlu0 %937
      %939 = vrot.lane.b32.xlu0 %v739, 24
      %v940 = vpop.permute.xlu0 %939
      %941 = vrot.lane.b32.xlu0 %v742, 24
      %v942 = vpop.permute.xlu0 %941
      %943 = vrot.lane.b32.xlu0 %v744, 24
      %v944 = vpop.permute.xlu0 %943
      %945 = vrot.lane.b32.xlu0 %v747, 24
      %v946 = vpop.permute.xlu0 %945
      %947 = vrot.lane.b32.xlu0 %v749, 24
      %v948 = vpop.permute.xlu0 %947
      %949 = vrot.lane.b32.xlu0 %v752, 24
      %v950 = vpop.permute.xlu0 %949
      %951 = vrot.lane.b32.xlu0 %v754, 24
      %v952 = vpop.permute.xlu0 %951
      %953 = vrot.lane.b32.xlu0 %v757, 24
      %v954 = vpop.permute.xlu0 %953
      %955 = vrot.lane.b32.xlu0 %v759, 24
      %v956 = vpop.permute.xlu0 %955
      %957 = vrot.lane.b32.xlu0 %v762, 24
      %v958 = vpop.permute.xlu0 %957
      %959 = vrot.lane.b32.xlu0 %v764, 24
      %v960 = vpop.permute.xlu0 %959
      %961 = vrot.lane.b32.xlu0 %v767, 24
      %v962 = vpop.permute.xlu0 %961
      %963 = vrot.lane.b32.xlu0 %v769, 24
      %v964 = vpop.permute.xlu0 %963
      %965 = vrot.lane.b32.xlu0 %v772, 24
      %v966 = vpop.permute.xlu0 %965
      %967 = vrot.lane.b32.xlu0 %v774, 24
      %v968 = vpop.permute.xlu0 %967
      %969 = vrot.lane.b32.xlu0 %v777, 24
      %v970 = vpop.permute.xlu0 %969
      %971 = vrot.lane.b32.xlu0 %v779, 24
      %v972 = vpop.permute.xlu0 %971
      %973 = vrot.lane.b32.xlu0 %v782, 24
      %v974 = vpop.permute.xlu0 %973
      %975 = vrot.lane.b32.xlu0 %v784, 24
      %v976 = vpop.permute.xlu0 %975
      %977 = vrot.lane.b32.xlu0 %v787, 24
      %v978 = vpop.permute.xlu0 %977
      %979 = vrot.lane.b32.xlu0 %v789, 24
      %v980 = vpop.permute.xlu0 %979
      %981 = vrot.lane.b32.xlu0 %v792, 24
      %v982 = vpop.permute.xlu0 %981
      %983 = vrot.lane.b32.xlu0 %v794, 24
      %v984 = vpop.permute.xlu0 %983
      %985 = vrot.lane.b32.xlu0 %v797, 24
      %v986 = vpop.permute.xlu0 %985
      %987 = vrot.lane.b32.xlu0 %v799, 24
      %v988 = vpop.permute.xlu0 %987
      %989 = vrot.lane.b32.xlu0 %v802, 24
      %v990 = vpop.permute.xlu0 %989
      %991 = vrot.lane.b32.xlu0 %v804, 24
      %v992 = vpop.permute.xlu0 %991
      %993 = vrot.lane.b32.xlu0 %v807, 24
      %v994 = vpop.permute.xlu0 %993
      %995 = vrot.lane.b32.xlu0 %v809, 24
      %v996 = vpop.permute.xlu0 %995
      %997 = vrot.lane.b32.xlu0 %v812, 24
      %v998 = vpop.permute.xlu0 %997
      %999 = vrot.lane.b32.xlu0 %v814, 24
      %v1000 = vpop.permute.xlu0 %999
      %1033 = vrot.lane.b32.xlu0 %v554, 36
      %v1034 = vpop.permute.xlu0 %1033
      %1035 = vrot.lane.b32.xlu0 %v555, 36
      %v1036 = vpop.permute.xlu0 %1035
      %1037 = vrot.lane.b32.xlu0 %v557, 36
      %v1038 = vpop.permute.xlu0 %1037
      %1039 = vrot.lane.b32.xlu0 %v558, 36
      %v1040 = vpop.permute.xlu0 %1039
      %1041 = vrot.lane.b32.xlu0 %v560, 36
      %v1042 = vpop.permute.xlu0 %1041
      %1043 = vrot.lane.b32.xlu0 %v561, 36
      %v1044 = vpop.permute.xlu0 %1043
      %1045 = vrot.lane.b32.xlu0 %v563, 36
      %v1046 = vpop.permute.xlu0 %1045
      %1047 = vrot.lane.b32.xlu0 %v564, 36
      %v1048 = vpop.permute.xlu0 %1047
      %1049 = vrot.lane.b32.xlu0 %v566, 36
      %v1050 = vpop.permute.xlu0 %1049
      %1051 = vrot.lane.b32.xlu0 %v567, 36
      %v1052 = vpop.permute.xlu0 %1051
      %1053 = vrot.lane.b32.xlu0 %v569, 36
      %v1054 = vpop.permute.xlu0 %1053
      %1055 = vrot.lane.b32.xlu0 %v570, 36
      %v1056 = vpop.permute.xlu0 %1055
      %1057 = vrot.lane.b32.xlu0 %v572, 36
      %v1058 = vpop.permute.xlu0 %1057
      %1059 = vrot.lane.b32.xlu0 %v573, 36
      %v1060 = vpop.permute.xlu0 %1059
      %1061 = vrot.lane.b32.xlu0 %v575, 36
      %v1062 = vpop.permute.xlu0 %1061
      %1063 = vrot.lane.b32.xlu0 %v576, 36
      %v1064 = vpop.permute.xlu0 %1063
      %1065 = vrot.lane.b32.xlu0 %v578, 36
      %v1066 = vpop.permute.xlu0 %1065
      %1067 = vrot.lane.b32.xlu0 %v579, 36
      %v1068 = vpop.permute.xlu0 %1067
      %1069 = vrot.lane.b32.xlu0 %v581, 36
      %v1070 = vpop.permute.xlu0 %1069
      %1071 = vrot.lane.b32.xlu0 %v582, 36
      %v1072 = vpop.permute.xlu0 %1071
      %1073 = vrot.lane.b32.xlu0 %v584, 36
      %v1074 = vpop.permute.xlu0 %1073
      %1075 = vrot.lane.b32.xlu0 %v585, 36
      %v1076 = vpop.permute.xlu0 %1075
      %1077 = vrot.lane.b32.xlu0 %v587, 36
      %v1078 = vpop.permute.xlu0 %1077
      %1079 = vrot.lane.b32.xlu0 %v588, 36
      %v1080 = vpop.permute.xlu0 %1079
      %1081 = vrot.lane.b32.xlu0 %v590, 36
      %v1082 = vpop.permute.xlu0 %1081
      %1083 = vrot.lane.b32.xlu0 %v591, 36
      %v1084 = vpop.permute.xlu0 %1083
      %1085 = vrot.lane.b32.xlu0 %v593, 36
      %v1086 = vpop.permute.xlu0 %1085
      %1087 = vrot.lane.b32.xlu0 %v594, 36
      %v1088 = vpop.permute.xlu0 %1087
      %1089 = vrot.lane.b32.xlu0 %v596, 36
      %v1090 = vpop.permute.xlu0 %1089
      %1091 = vrot.lane.b32.xlu0 %v597, 36
      %v1092 = vpop.permute.xlu0 %1091
      %1093 = vrot.lane.b32.xlu0 %v599, 36
      %v1094 = vpop.permute.xlu0 %1093
      %1095 = vrot.lane.b32.xlu0 %v600, 36
      %v1096 = vpop.permute.xlu0 %1095
      %1129 = vrot.lane.b32.xlu0 %v661, 48
      %v1130 = vpop.permute.xlu0 %1129
      %1131 = vrot.lane.b32.xlu0 %v663, 48
      %v1132 = vpop.permute.xlu0 %1131
      %1133 = vrot.lane.b32.xlu0 %v666, 48
      %v1134 = vpop.permute.xlu0 %1133
      %1135 = vrot.lane.b32.xlu0 %v668, 48
      %v1136 = vpop.permute.xlu0 %1135
      %1137 = vrot.lane.b32.xlu0 %v671, 48
      %v1138 = vpop.permute.xlu0 %1137
      %1139 = vrot.lane.b32.xlu0 %v673, 48
      %v1140 = vpop.permute.xlu0 %1139
      %1141 = vrot.lane.b32.xlu0 %v676, 48
      %v1142 = vpop.permute.xlu0 %1141
      %1143 = vrot.lane.b32.xlu0 %v678, 48
      %v1144 = vpop.permute.xlu0 %1143
      %1145 = vrot.lane.b32.xlu0 %v681, 48
      %v1146 = vpop.permute.xlu0 %1145
      %1147 = vrot.lane.b32.xlu0 %v683, 48
      %v1148 = vpop.permute.xlu0 %1147
      %1149 = vrot.lane.b32.xlu0 %v686, 48
      %v1150 = vpop.permute.xlu0 %1149
      %1151 = vrot.lane.b32.xlu0 %v688, 48
      %v1152 = vpop.permute.xlu0 %1151
      %1153 = vrot.lane.b32.xlu0 %v691, 48
      %v1154 = vpop.permute.xlu0 %1153
      %1155 = vrot.lane.b32.xlu0 %v693, 48
      %v1156 = vpop.permute.xlu0 %1155
      %1157 = vrot.lane.b32.xlu0 %v696, 48
      %v1158 = vpop.permute.xlu0 %1157
      %1159 = vrot.lane.b32.xlu0 %v698, 48
      %v1160 = vpop.permute.xlu0 %1159
      %1161 = vrot.lane.b32.xlu0 %v701, 48
      %v1162 = vpop.permute.xlu0 %1161
      %1163 = vrot.lane.b32.xlu0 %v703, 48
      %v1164 = vpop.permute.xlu0 %1163
      %1165 = vrot.lane.b32.xlu0 %v706, 48
      %v1166 = vpop.permute.xlu0 %1165
      %1167 = vrot.lane.b32.xlu0 %v708, 48
      %v1168 = vpop.permute.xlu0 %1167
      %1169 = vrot.lane.b32.xlu0 %v711, 48
      %v1170 = vpop.permute.xlu0 %1169
      %1171 = vrot.lane.b32.xlu0 %v713, 48
      %v1172 = vpop.permute.xlu0 %1171
      %1173 = vrot.lane.b32.xlu0 %v716, 48
      %v1174 = vpop.permute.xlu0 %1173
      %1175 = vrot.lane.b32.xlu0 %v718, 48
      %v1176 = vpop.permute.xlu0 %1175
      %1177 = vrot.lane.b32.xlu0 %v721, 48
      %v1178 = vpop.permute.xlu0 %1177
      %1179 = vrot.lane.b32.xlu0 %v723, 48
      %v1180 = vpop.permute.xlu0 %1179
      %1181 = vrot.lane.b32.xlu0 %v726, 48
      %v1182 = vpop.permute.xlu0 %1181
      %1183 = vrot.lane.b32.xlu0 %v728, 48
      %v1184 = vpop.permute.xlu0 %1183
      %1185 = vrot.lane.b32.xlu0 %v731, 48
      %v1186 = vpop.permute.xlu0 %1185
      %1187 = vrot.lane.b32.xlu0 %v733, 48
      %v1188 = vpop.permute.xlu0 %1187
      %1189 = vrot.lane.b32.xlu0 %v820, 48
      %v1190 = vpop.permute.xlu0 %1189
      %1191 = vrot.lane.b32.xlu0 %v822, 48
      %v1192 = vpop.permute.xlu0 %1191
      %1225 = vrot.lane.b32.xlu0 %v742, 60
      %v1226 = vpop.permute.xlu0 %1225
      %1227 = vrot.lane.b32.xlu0 %v744, 60
      %v1228 = vpop.permute.xlu0 %1227
      %1229 = vrot.lane.b32.xlu0 %v747, 60
      %v1230 = vpop.permute.xlu0 %1229
      %1231 = vrot.lane.b32.xlu0 %v749, 60
      %v1232 = vpop.permute.xlu0 %1231
      %1233 = vrot.lane.b32.xlu0 %v752, 60
      %v1234 = vpop.permute.xlu0 %1233
      %1235 = vrot.lane.b32.xlu0 %v754, 60
      %v1236 = vpop.permute.xlu0 %1235
      %1237 = vrot.lane.b32.xlu0 %v757, 60
      %v1238 = vpop.permute.xlu0 %1237
      %1239 = vrot.lane.b32.xlu0 %v759, 60
      %v1240 = vpop.permute.xlu0 %1239
      %1241 = vrot.lane.b32.xlu0 %v762, 60
      %v1242 = vpop.permute.xlu0 %1241
      %1243 = vrot.lane.b32.xlu0 %v764, 60
      %v1244 = vpop.permute.xlu0 %1243
      %1245 = vrot.lane.b32.xlu0 %v767, 60
      %v1246 = vpop.permute.xlu0 %1245
      %1247 = vrot.lane.b32.xlu0 %v769, 60
      %v1248 = vpop.permute.xlu0 %1247
      %1249 = vrot.lane.b32.xlu0 %v772, 60
      %v1250 = vpop.permute.xlu0 %1249
      %1251 = vrot.lane.b32.xlu0 %v774, 60
      %v1252 = vpop.permute.xlu0 %1251
      %1253 = vrot.lane.b32.xlu0 %v777, 60
      %v1254 = vpop.permute.xlu0 %1253
      %1255 = vrot.lane.b32.xlu0 %v779, 60
      %v1256 = vpop.permute.xlu0 %1255
      %1257 = vrot.lane.b32.xlu0 %v782, 60
      %v1258 = vpop.permute.xlu0 %1257
      %1259 = vrot.lane.b32.xlu0 %v784, 60
      %v1260 = vpop.permute.xlu0 %1259
      %1261 = vrot.lane.b32.xlu0 %v787, 60
      %v1262 = vpop.permute.xlu0 %1261
      %1263 = vrot.lane.b32.xlu0 %v789, 60
      %v1264 = vpop.permute.xlu0 %1263
      %1265 = vrot.lane.b32.xlu0 %v792, 60
      %v1266 = vpop.permute.xlu0 %1265
      %1267 = vrot.lane.b32.xlu0 %v794, 60
      %v1268 = vpop.permute.xlu0 %1267
      %1269 = vrot.lane.b32.xlu0 %v797, 60
      %v1270 = vpop.permute.xlu0 %1269
      %1271 = vrot.lane.b32.xlu0 %v799, 60
      %v1272 = vpop.permute.xlu0 %1271
      %1273 = vrot.lane.b32.xlu0 %v802, 60
      %v1274 = vpop.permute.xlu0 %1273
      %1275 = vrot.lane.b32.xlu0 %v804, 60
      %v1276 = vpop.permute.xlu0 %1275
      %1277 = vrot.lane.b32.xlu0 %v807, 60
      %v1278 = vpop.permute.xlu0 %1277
      %1279 = vrot.lane.b32.xlu0 %v809, 60
      %v1280 = vpop.permute.xlu0 %1279
      %1281 = vrot.lane.b32.xlu0 %v812, 60
      %v1282 = vpop.permute.xlu0 %1281
      %1283 = vrot.lane.b32.xlu0 %v814, 60
      %v1284 = vpop.permute.xlu0 %1283
      %1285 = vrot.lane.b32.xlu0 %v825, 60
      %v1286 = vpop.permute.xlu0 %1285
      %1287 = vrot.lane.b32.xlu0 %v827, 60
      %v1288 = vpop.permute.xlu0 %1287
      %1321 = vrot.lane.b32.xlu0 %v557, 72
      %v1322 = vpop.permute.xlu0 %1321
      %1323 = vrot.lane.b32.xlu0 %v558, 72
      %v1324 = vpop.permute.xlu0 %1323
      %1325 = vrot.lane.b32.xlu0 %v560, 72
      %v1326 = vpop.permute.xlu0 %1325
      %1327 = vrot.lane.b32.xlu0 %v561, 72
      %v1328 = vpop.permute.xlu0 %1327
      %1329 = vrot.lane.b32.xlu0 %v563, 72
      %v1330 = vpop.permute.xlu0 %1329
      %1331 = vrot.lane.b32.xlu0 %v564, 72
      %v1332 = vpop.permute.xlu0 %1331
      %1333 = vrot.lane.b32.xlu0 %v566, 72
      %v1334 = vpop.permute.xlu0 %1333
      %1335 = vrot.lane.b32.xlu0 %v567, 72
      %v1336 = vpop.permute.xlu0 %1335
      %1337 = vrot.lane.b32.xlu0 %v569, 72
      %v1338 = vpop.permute.xlu0 %1337
      %1339 = vrot.lane.b32.xlu0 %v570, 72
      %v1340 = vpop.permute.xlu0 %1339
      %1341 = vrot.lane.b32.xlu0 %v572, 72
      %v1342 = vpop.permute.xlu0 %1341
      %1343 = vrot.lane.b32.xlu0 %v573, 72
      %v1344 = vpop.permute.xlu0 %1343
      %1345 = vrot.lane.b32.xlu0 %v575, 72
      %v1346 = vpop.permute.xlu0 %1345
      %1347 = vrot.lane.b32.xlu0 %v576, 72
      %v1348 = vpop.permute.xlu0 %1347
      %1349 = vrot.lane.b32.xlu0 %v578, 72
      %v1350 = vpop.permute.xlu0 %1349
      %1351 = vrot.lane.b32.xlu0 %v579, 72
      %v1352 = vpop.permute.xlu0 %1351
      %1353 = vrot.lane.b32.xlu0 %v581, 72
      %v1354 = vpop.permute.xlu0 %1353
      %1355 = vrot.lane.b32.xlu0 %v582, 72
      %v1356 = vpop.permute.xlu0 %1355
      %1357 = vrot.lane.b32.xlu0 %v584, 72
      %v1358 = vpop.permute.xlu0 %1357
      %1359 = vrot.lane.b32.xlu0 %v585, 72
      %v1360 = vpop.permute.xlu0 %1359
      %1361 = vrot.lane.b32.xlu0 %v587, 72
      %v1362 = vpop.permute.xlu0 %1361
      %1363 = vrot.lane.b32.xlu0 %v588, 72
      %v1364 = vpop.permute.xlu0 %1363
      %1365 = vrot.lane.b32.xlu0 %v590, 72
      %v1366 = vpop.permute.xlu0 %1365
      %1367 = vrot.lane.b32.xlu0 %v591, 72
      %v1368 = vpop.permute.xlu0 %1367
      %1369 = vrot.lane.b32.xlu0 %v593, 72
      %v1370 = vpop.permute.xlu0 %1369
      %1371 = vrot.lane.b32.xlu0 %v594, 72
      %v1372 = vpop.permute.xlu0 %1371
      %1373 = vrot.lane.b32.xlu0 %v596, 72
      %v1374 = vpop.permute.xlu0 %1373
      %1375 = vrot.lane.b32.xlu0 %v597, 72
      %v1376 = vpop.permute.xlu0 %1375
      %1377 = vrot.lane.b32.xlu0 %v599, 72
      %v1378 = vpop.permute.xlu0 %1377
      %1379 = vrot.lane.b32.xlu0 %v600, 72
      %v1380 = vpop.permute.xlu0 %1379
      %1381 = vrot.lane.b32.xlu0 %v602, 72
      %v1382 = vpop.permute.xlu0 %1381
      %1383 = vrot.lane.b32.xlu0 %v603, 72
      %v1384 = vpop.permute.xlu0 %1383
      %1417 = vrot.lane.b32.xlu0 %v666, 84
      %v1418 = vpop.permute.xlu0 %1417
      %1419 = vrot.lane.b32.xlu0 %v668, 84
      %v1420 = vpop.permute.xlu0 %1419
      %1421 = vrot.lane.b32.xlu0 %v671, 84
      %v1422 = vpop.permute.xlu0 %1421
      %1423 = vrot.lane.b32.xlu0 %v673, 84
      %v1424 = vpop.permute.xlu0 %1423
      %1425 = vrot.lane.b32.xlu0 %v676, 84
      %v1426 = vpop.permute.xlu0 %1425
      %1427 = vrot.lane.b32.xlu0 %v678, 84
      %v1428 = vpop.permute.xlu0 %1427
      %1429 = vrot.lane.b32.xlu0 %v681, 84
      %v1430 = vpop.permute.xlu0 %1429
      %1431 = vrot.lane.b32.xlu0 %v683, 84
      %v1432 = vpop.permute.xlu0 %1431
      %1433 = vrot.lane.b32.xlu0 %v686, 84
      %v1434 = vpop.permute.xlu0 %1433
      %1435 = vrot.lane.b32.xlu0 %v688, 84
      %v1436 = vpop.permute.xlu0 %1435
      %1437 = vrot.lane.b32.xlu0 %v691, 84
      %v1438 = vpop.permute.xlu0 %1437
      %1439 = vrot.lane.b32.xlu0 %v693, 84
      %v1440 = vpop.permute.xlu0 %1439
      %1441 = vrot.lane.b32.xlu0 %v696, 84
      %v1442 = vpop.permute.xlu0 %1441
      %1443 = vrot.lane.b32.xlu0 %v698, 84
      %v1444 = vpop.permute.xlu0 %1443
      %1445 = vrot.lane.b32.xlu0 %v701, 84
      %v1446 = vpop.permute.xlu0 %1445
      %1447 = vrot.lane.b32.xlu0 %v703, 84
      %v1448 = vpop.permute.xlu0 %1447
      %1449 = vrot.lane.b32.xlu0 %v706, 84
      %v1450 = vpop.permute.xlu0 %1449
      %1451 = vrot.lane.b32.xlu0 %v708, 84
      %v1452 = vpop.permute.xlu0 %1451
      %1453 = vrot.lane.b32.xlu0 %v711, 84
      %v1454 = vpop.permute.xlu0 %1453
      %1455 = vrot.lane.b32.xlu0 %v713, 84
      %v1456 = vpop.permute.xlu0 %1455
      %1457 = vrot.lane.b32.xlu0 %v716, 84
      %v1458 = vpop.permute.xlu0 %1457
      %1459 = vrot.lane.b32.xlu0 %v718, 84
      %v1460 = vpop.permute.xlu0 %1459
      %1461 = vrot.lane.b32.xlu0 %v721, 84
      %v1462 = vpop.permute.xlu0 %1461
      %1463 = vrot.lane.b32.xlu0 %v723, 84
      %v1464 = vpop.permute.xlu0 %1463
      %1465 = vrot.lane.b32.xlu0 %v726, 84
      %v1466 = vpop.permute.xlu0 %1465
      %1467 = vrot.lane.b32.xlu0 %v728, 84
      %v1468 = vpop.permute.xlu0 %1467
      %1469 = vrot.lane.b32.xlu0 %v731, 84
      %v1470 = vpop.permute.xlu0 %1469
      %1471 = vrot.lane.b32.xlu0 %v733, 84
      %v1472 = vpop.permute.xlu0 %1471
      %1473 = vrot.lane.b32.xlu0 %v820, 84
      %v1474 = vpop.permute.xlu0 %1473
      %1475 = vrot.lane.b32.xlu0 %v822, 84
      %v1476 = vpop.permute.xlu0 %1475
      %1477 = vrot.lane.b32.xlu0 %v833, 84
      %v1478 = vpop.permute.xlu0 %1477
      %1479 = vrot.lane.b32.xlu0 %v835, 84
      %v1480 = vpop.permute.xlu0 %1479
      %1513 = vrot.lane.b32.xlu0 %v747, 96
      %v1514 = vpop.permute.xlu0 %1513
      %1515 = vrot.lane.b32.xlu0 %v749, 96
      %v1516 = vpop.permute.xlu0 %1515
      %1517 = vrot.lane.b32.xlu0 %v752, 96
      %v1518 = vpop.permute.xlu0 %1517
      %1519 = vrot.lane.b32.xlu0 %v754, 96
      %v1520 = vpop.permute.xlu0 %1519
      %1521 = vrot.lane.b32.xlu0 %v757, 96
      %v1522 = vpop.permute.xlu0 %1521
      %1523 = vrot.lane.b32.xlu0 %v759, 96
      %v1524 = vpop.permute.xlu0 %1523
      %1525 = vrot.lane.b32.xlu0 %v762, 96
      %v1526 = vpop.permute.xlu0 %1525
      %1527 = vrot.lane.b32.xlu0 %v764, 96
      %v1528 = vpop.permute.xlu0 %1527
      %1529 = vrot.lane.b32.xlu0 %v767, 96
      %v1530 = vpop.permute.xlu0 %1529
      %1531 = vrot.lane.b32.xlu0 %v769, 96
      %v1532 = vpop.permute.xlu0 %1531
      %1533 = vrot.lane.b32.xlu0 %v772, 96
      %v1534 = vpop.permute.xlu0 %1533
      %1535 = vrot.lane.b32.xlu0 %v774, 96
      %v1536 = vpop.permute.xlu0 %1535
      %1537 = vrot.lane.b32.xlu0 %v777, 96
      %v1538 = vpop.permute.xlu0 %1537
      %1539 = vrot.lane.b32.xlu0 %v779, 96
      %v1540 = vpop.permute.xlu0 %1539
      %1541 = vrot.lane.b32.xlu0 %v782, 96
      %v1542 = vpop.permute.xlu0 %1541
      %1543 = vrot.lane.b32.xlu0 %v784, 96
      %v1544 = vpop.permute.xlu0 %1543
      %1545 = vrot.lane.b32.xlu0 %v787, 96
      %v1546 = vpop.permute.xlu0 %1545
      %1547 = vrot.lane.b32.xlu0 %v789, 96
      %v1548 = vpop.permute.xlu0 %1547
      %1549 = vrot.lane.b32.xlu0 %v792, 96
      %v1550 = vpop.permute.xlu0 %1549
      %1551 = vrot.lane.b32.xlu0 %v794, 96
      %v1552 = vpop.permute.xlu0 %1551
      %1553 = vrot.lane.b32.xlu0 %v797, 96
      %v1554 = vpop.permute.xlu0 %1553
      %1555 = vrot.lane.b32.xlu0 %v799, 96
      %v1556 = vpop.permute.xlu0 %1555
      %1557 = vrot.lane.b32.xlu0 %v802, 96
      %v1558 = vpop.permute.xlu0 %1557
      %1559 = vrot.lane.b32.xlu0 %v804, 96
      %v1560 = vpop.permute.xlu0 %1559
      %1561 = vrot.lane.b32.xlu0 %v807, 96
      %v1562 = vpop.permute.xlu0 %1561
      %1563 = vrot.lane.b32.xlu0 %v809, 96
      %v1564 = vpop.permute.xlu0 %1563
      %1565 = vrot.lane.b32.xlu0 %v812, 96
      %v1566 = vpop.permute.xlu0 %1565
      %1567 = vrot.lane.b32.xlu0 %v814, 96
      %v1568 = vpop.permute.xlu0 %1567
      %1569 = vrot.lane.b32.xlu0 %v825, 96
      %v1570 = vpop.permute.xlu0 %1569
      %1571 = vrot.lane.b32.xlu0 %v827, 96
      %v1572 = vpop.permute.xlu0 %1571
      %1573 = vrot.lane.b32.xlu0 %v838, 96
      %v1574 = vpop.permute.xlu0 %1573
      %1575 = vrot.lane.b32.xlu0 %v840, 96
      %v1576 = vpop.permute.xlu0 %1575
      %v1609 = vsel %vm473, %v551, %v842
      %v1610 = vsel %vm473, %v552, %v844
      %v1611 = vsel %vm473, %v554, %v846
      %v1612 = vsel %vm473, %v555, %v848
      %v1613 = vsel %vm473, %v557, %v850
      %v1614 = vsel %vm473, %v558, %v852
      %v1615 = vsel %vm473, %v560, %v854
      %v1616 = vsel %vm473, %v561, %v856
      %v1617 = vsel %vm473, %v563, %v858
      %v1618 = vsel %vm473, %v564, %v860
      %v1619 = vsel %vm473, %v566, %v862
      %v1620 = vsel %vm473, %v567, %v864
      %v1621 = vsel %vm473, %v569, %v866
      %v1622 = vsel %vm473, %v570, %v868
      %v1623 = vsel %vm473, %v572, %v870
      %v1624 = vsel %vm473, %v573, %v872
      %v1625 = vsel %vm473, %v575, %v874
      %v1626 = vsel %vm473, %v576, %v876
      %v1627 = vsel %vm473, %v578, %v878
      %v1628 = vsel %vm473, %v579, %v880
      %v1629 = vsel %vm473, %v581, %v882
      %v1630 = vsel %vm473, %v582, %v884
      %v1631 = vsel %vm473, %v584, %v886
      %v1632 = vsel %vm473, %v585, %v888
      %v1633 = vsel %vm473, %v587, %v890
      %v1634 = vsel %vm473, %v588, %v892
      %v1635 = vsel %vm473, %v590, %v894
      %v1636 = vsel %vm473, %v591, %v896
      %v1637 = vsel %vm473, %v593, %v898
      %v1638 = vsel %vm473, %v594, %v900
      %v1639 = vsel %vm473, %v596, %v902
      %v1640 = vsel %vm473, %v597, %v904
      %vm1641 = vcmask 195584
      %v1642 = vsel %vm1641, %v1609, %v938
      %v1643 = vsel %vm1641, %v1610, %v940
      %v1644 = vsel %vm1641, %v1611, %v942
      %v1645 = vsel %vm1641, %v1612, %v944
      %v1646 = vsel %vm1641, %v1613, %v946
      %v1647 = vsel %vm1641, %v1614, %v948
      %v1648 = vsel %vm1641, %v1615, %v950
      %v1649 = vsel %vm1641, %v1616, %v952
      %v1650 = vsel %vm1641, %v1617, %v954
      %v1651 = vsel %vm1641, %v1618, %v956
      %v1652 = vsel %vm1641, %v1619, %v958
      %v1653 = vsel %vm1641, %v1620, %v960
      %v1654 = vsel %vm1641, %v1621, %v962
      %v1655 = vsel %vm1641, %v1622, %v964
      %v1656 = vsel %vm1641, %v1623, %v966
      %v1657 = vsel %vm1641, %v1624, %v968
      %v1658 = vsel %vm1641, %v1625, %v970
      %v1659 = vsel %vm1641, %v1626, %v972
      %v1660 = vsel %vm1641, %v1627, %v974
      %v1661 = vsel %vm1641, %v1628, %v976
      %v1662 = vsel %vm1641, %v1629, %v978
      %v1663 = vsel %vm1641, %v1630, %v980
      %v1664 = vsel %vm1641, %v1631, %v982
      %v1665 = vsel %vm1641, %v1632, %v984
      %v1666 = vsel %vm1641, %v1633, %v986
      %v1667 = vsel %vm1641, %v1634, %v988
      %v1668 = vsel %vm1641, %v1635, %v990
      %v1669 = vsel %vm1641, %v1636, %v992
      %v1670 = vsel %vm1641, %v1637, %v994
      %v1671 = vsel %vm1641, %v1638, %v996
      %v1672 = vsel %vm1641, %v1639, %v998
      %v1673 = vsel %vm1641, %v1640, %v1000
      %vm1674 = vcmask 293888
      %v1675 = vsel %vm1674, %v1642, %v1034
      %v1676 = vsel %vm1674, %v1643, %v1036
      %v1677 = vsel %vm1674, %v1644, %v1038
      %v1678 = vsel %vm1674, %v1645, %v1040
      %v1679 = vsel %vm1674, %v1646, %v1042
      %v1680 = vsel %vm1674, %v1647, %v1044
      %v1681 = vsel %vm1674, %v1648, %v1046
      %v1682 = vsel %vm1674, %v1649, %v1048
      %v1683 = vsel %vm1674, %v1650, %v1050
      %v1684 = vsel %vm1674, %v1651, %v1052
      %v1685 = vsel %vm1674, %v1652, %v1054
      %v1686 = vsel %vm1674, %v1653, %v1056
      %v1687 = vsel %vm1674, %v1654, %v1058
      %v1688 = vsel %vm1674, %v1655, %v1060
      %v1689 = vsel %vm1674, %v1656, %v1062
      %v1690 = vsel %vm1674, %v1657, %v1064
      %v1691 = vsel %vm1674, %v1658, %v1066
      %v1692 = vsel %vm1674, %v1659, %v1068
      %v1693 = vsel %vm1674, %v1660, %v1070
      %v1694 = vsel %vm1674, %v1661, %v1072
      %v1695 = vsel %vm1674, %v1662, %v1074
      %v1696 = vsel %vm1674, %v1663, %v1076
      %v1697 = vsel %vm1674, %v1664, %v1078
      %v1698 = vsel %vm1674, %v1665, %v1080
      %v1699 = vsel %vm1674, %v1666, %v1082
      %v1700 = vsel %vm1674, %v1667, %v1084
      %v1701 = vsel %vm1674, %v1668, %v1086
      %v1702 = vsel %vm1674, %v1669, %v1088
      %v1703 = vsel %vm1674, %v1670, %v1090
      %v1704 = vsel %vm1674, %v1671, %v1092
      %v1705 = vsel %vm1674, %v1672, %v1094
      %v1706 = vsel %vm1674, %v1673, %v1096
      %vm1707 = vcmask 392192
      %v1708 = vsel %vm1707, %v1675, %v1130
      %v1709 = vsel %vm1707, %v1676, %v1132
      %v1710 = vsel %vm1707, %v1677, %v1134
      %v1711 = vsel %vm1707, %v1678, %v1136
      %v1712 = vsel %vm1707, %v1679, %v1138
      %v1713 = vsel %vm1707, %v1680, %v1140
      %v1714 = vsel %vm1707, %v1681, %v1142
      %v1715 = vsel %vm1707, %v1682, %v1144
      %v1716 = vsel %vm1707, %v1683, %v1146
      %v1717 = vsel %vm1707, %v1684, %v1148
      %v1718 = vsel %vm1707, %v1685, %v1150
      %v1719 = vsel %vm1707, %v1686, %v1152
      %v1720 = vsel %vm1707, %v1687, %v1154
      %v1721 = vsel %vm1707, %v1688, %v1156
      %v1722 = vsel %vm1707, %v1689, %v1158
      %v1723 = vsel %vm1707, %v1690, %v1160
      %v1724 = vsel %vm1707, %v1691, %v1162
      %v1725 = vsel %vm1707, %v1692, %v1164
      %v1726 = vsel %vm1707, %v1693, %v1166
      %v1727 = vsel %vm1707, %v1694, %v1168
      %v1728 = vsel %vm1707, %v1695, %v1170
      %v1729 = vsel %vm1707, %v1696, %v1172
      %v1730 = vsel %vm1707, %v1697, %v1174
      %v1731 = vsel %vm1707, %v1698, %v1176
      %v1732 = vsel %vm1707, %v1699, %v1178
      %v1733 = vsel %vm1707, %v1700, %v1180
      %v1734 = vsel %vm1707, %v1701, %v1182
      %v1735 = vsel %vm1707, %v1702, %v1184
      %v1736 = vsel %vm1707, %v1703, %v1186
      %v1737 = vsel %vm1707, %v1704, %v1188
      %v1738 = vsel %vm1707, %v1705, %v1190
      %v1739 = vsel %vm1707, %v1706, %v1192
      %vm1740 = vcmask 490496
      %v1741 = vsel %vm1740, %v1708, %v1226
      %v1742 = vsel %vm1740, %v1709, %v1228
      %v1743 = vsel %vm1740, %v1710, %v1230
      %v1744 = vsel %vm1740, %v1711, %v1232
      %v1745 = vsel %vm1740, %v1712, %v1234
      %v1746 = vsel %vm1740, %v1713, %v1236
      %v1747 = vsel %vm1740, %v1714, %v1238
      %v1748 = vsel %vm1740, %v1715, %v1240
      %v1749 = vsel %vm1740, %v1716, %v1242
      %v1750 = vsel %vm1740, %v1717, %v1244
      %v1751 = vsel %vm1740, %v1718, %v1246
      %v1752 = vsel %vm1740, %v1719, %v1248
      %v1753 = vsel %vm1740, %v1720, %v1250
      %v1754 = vsel %vm1740, %v1721, %v1252
      %v1755 = vsel %vm1740, %v1722, %v1254
      %v1756 = vsel %vm1740, %v1723, %v1256
      %v1757 = vsel %vm1740, %v1724, %v1258
      %v1758 = vsel %vm1740, %v1725, %v1260
      %v1759 = vsel %vm1740, %v1726, %v1262
      %v1760 = vsel %vm1740, %v1727, %v1264
      %v1761 = vsel %vm1740, %v1728, %v1266
      %v1762 = vsel %vm1740, %v1729, %v1268
      %v1763 = vsel %vm1740, %v1730, %v1270
      %v1764 = vsel %vm1740, %v1731, %v1272
      %v1765 = vsel %vm1740, %v1732, %v1274
      %v1766 = vsel %vm1740, %v1733, %v1276
      %v1767 = vsel %vm1740, %v1734, %v1278
      %v1768 = vsel %vm1740, %v1735, %v1280
      %v1769 = vsel %vm1740, %v1736, %v1282
      %v1770 = vsel %vm1740, %v1737, %v1284
      %v1771 = vsel %vm1740, %v1738, %v1286
      %v1772 = vsel %vm1740, %v1739, %v1288
      %vm1773 = vcmask 588800
      %v1774 = vsel %vm1773, %v1741, %v1322
      %v1775 = vsel %vm1773, %v1742, %v1324
      %v1776 = vsel %vm1773, %v1743, %v1326
      %v1777 = vsel %vm1773, %v1744, %v1328
      %v1778 = vsel %vm1773, %v1745, %v1330
      %v1779 = vsel %vm1773, %v1746, %v1332
      %v1780 = vsel %vm1773, %v1747, %v1334
      %v1781 = vsel %vm1773, %v1748, %v1336
      %v1782 = vsel %vm1773, %v1749, %v1338
      %v1783 = vsel %vm1773, %v1750, %v1340
      %v1784 = vsel %vm1773, %v1751, %v1342
      %v1785 = vsel %vm1773, %v1752, %v1344
      %v1786 = vsel %vm1773, %v1753, %v1346
      %v1787 = vsel %vm1773, %v1754, %v1348
      %v1788 = vsel %vm1773, %v1755, %v1350
      %v1789 = vsel %vm1773, %v1756, %v1352
      %v1790 = vsel %vm1773, %v1757, %v1354
      %v1791 = vsel %vm1773, %v1758, %v1356
      %v1792 = vsel %vm1773, %v1759, %v1358
      %v1793 = vsel %vm1773, %v1760, %v1360
      %v1794 = vsel %vm1773, %v1761, %v1362
      %v1795 = vsel %vm1773, %v1762, %v1364
      %v1796 = vsel %vm1773, %v1763, %v1366
      %v1797 = vsel %vm1773, %v1764, %v1368
      %v1798 = vsel %vm1773, %v1765, %v1370
      %v1799 = vsel %vm1773, %v1766, %v1372
      %v1800 = vsel %vm1773, %v1767, %v1374
      %v1801 = vsel %vm1773, %v1768, %v1376
      %v1802 = vsel %vm1773, %v1769, %v1378
      %v1803 = vsel %vm1773, %v1770, %v1380
      %v1804 = vsel %vm1773, %v1771, %v1382
      %v1805 = vsel %vm1773, %v1772, %v1384
      %vm1806 = vcmask 687104
      %v1807 = vsel %vm1806, %v1774, %v1418
      %v1808 = vsel %vm1806, %v1775, %v1420
      %v1809 = vsel %vm1806, %v1776, %v1422
      %v1810 = vsel %vm1806, %v1777, %v1424
      %v1811 = vsel %vm1806, %v1778, %v1426
      %v1812 = vsel %vm1806, %v1779, %v1428
      %v1813 = vsel %vm1806, %v1780, %v1430
      %v1814 = vsel %vm1806, %v1781, %v1432
      %v1815 = vsel %vm1806, %v1782, %v1434
      %v1816 = vsel %vm1806, %v1783, %v1436
      %v1817 = vsel %vm1806, %v1784, %v1438
      %v1818 = vsel %vm1806, %v1785, %v1440
      %v1819 = vsel %vm1806, %v1786, %v1442
      %v1820 = vsel %vm1806, %v1787, %v1444
      %v1821 = vsel %vm1806, %v1788, %v1446
      %v1822 = vsel %vm1806, %v1789, %v1448
      %v1823 = vsel %vm1806, %v1790, %v1450
      %v1824 = vsel %vm1806, %v1791, %v1452
      %v1825 = vsel %vm1806, %v1792, %v1454
      %v1826 = vsel %vm1806, %v1793, %v1456
      %v1827 = vsel %vm1806, %v1794, %v1458
      %v1828 = vsel %vm1806, %v1795, %v1460
      %v1829 = vsel %vm1806, %v1796, %v1462
      %v1830 = vsel %vm1806, %v1797, %v1464
      %v1831 = vsel %vm1806, %v1798, %v1466
      %v1832 = vsel %vm1806, %v1799, %v1468
      %v1833 = vsel %vm1806, %v1800, %v1470
      %v1834 = vsel %vm1806, %v1801, %v1472
      %v1835 = vsel %vm1806, %v1802, %v1474
      %v1836 = vsel %vm1806, %v1803, %v1476
      %v1837 = vsel %vm1806, %v1804, %v1478
      %v1838 = vsel %vm1806, %v1805, %v1480
      %vm1839 = vcmask 785408
      %v1840 = vsel %vm1839, %v1807, %v1514
      %v1841 = vsel %vm1839, %v1808, %v1516
      %v1842 = vsel %vm1839, %v1809, %v1518
      %v1843 = vsel %vm1839, %v1810, %v1520
      %v1844 = vsel %vm1839, %v1811, %v1522
      %v1845 = vsel %vm1839, %v1812, %v1524
      %v1846 = vsel %vm1839, %v1813, %v1526
      %v1847 = vsel %vm1839, %v1814, %v1528
      %v1848 = vsel %vm1839, %v1815, %v1530
      %v1849 = vsel %vm1839, %v1816, %v1532
      %v1850 = vsel %vm1839, %v1817, %v1534
      %v1851 = vsel %vm1839, %v1818, %v1536
      %v1852 = vsel %vm1839, %v1819, %v1538
      %v1853 = vsel %vm1839, %v1820, %v1540
      %v1854 = vsel %vm1839, %v1821, %v1542
      %v1855 = vsel %vm1839, %v1822, %v1544
      %v1856 = vsel %vm1839, %v1823, %v1546
      %v1857 = vsel %vm1839, %v1824, %v1548
      %v1858 = vsel %vm1839, %v1825, %v1550
      %v1859 = vsel %vm1839, %v1826, %v1552
      %v1860 = vsel %vm1839, %v1827, %v1554
      %v1861 = vsel %vm1839, %v1828, %v1556
      %v1862 = vsel %vm1839, %v1829, %v1558
      %v1863 = vsel %vm1839, %v1830, %v1560
      %v1864 = vsel %vm1839, %v1831, %v1562
      %v1865 = vsel %vm1839, %v1832, %v1564
      %v1866 = vsel %vm1839, %v1833, %v1566
      %v1867 = vsel %vm1839, %v1834, %v1568
      %v1868 = vsel %vm1839, %v1835, %v1570
      %v1869 = vsel %vm1839, %v1836, %v1572
      %v1870 = vsel %vm1839, %v1837, %v1574
      %v1871 = vsel %vm1839, %v1838, %v1576
      %v1872 = vpack.c.bf16 %v1841, %v1840
      %v1873 = vpack.c.bf16 %v1843, %v1842
      %v1874 = vpack.c.bf16 %v1845, %v1844
      %v1875 = vpack.c.bf16 %v1847, %v1846
      %v1876 = vpack.c.bf16 %v1849, %v1848
      %v1877 = vpack.c.bf16 %v1851, %v1850
      %v1878 = vpack.c.bf16 %v1853, %v1852
      %v1879 = vpack.c.bf16 %v1855, %v1854
      %v1880 = vpack.c.bf16 %v1857, %v1856
      %v1881 = vpack.c.bf16 %v1859, %v1858
      %v1882 = vpack.c.bf16 %v1861, %v1860
      %v1883 = vpack.c.bf16 %v1863, %v1862
      %v1884 = vpack.c.bf16 %v1865, %v1864
      %v1885 = vpack.c.bf16 %v1867, %v1866
      %v1886 = vpack.c.bf16 %v1869, %v1868
      %v1887 = vpack.c.bf16 %v1871, %v1870
      %v1888 = vld [vmem:[%s2] sm:$0xf]
      %v1889 = vld [vmem:[%s2 + $0x4] sm:$0xf]
      %v1890 = vld [vmem:[%s2 + $0x8] sm:$0xf]
      %v1891 = vld [vmem:[%s2 + $0xc] sm:$0xf]
      %v1892 = vld [vmem:[%s2 + $0x10] sm:$0xf]
      %v1893 = vld [vmem:[%s2 + $0x14] sm:$0xf]
      %v1894 = vld [vmem:[%s2 + $0x18] sm:$0xf]
      %v1895 = vld [vmem:[%s2 + $0x1c] sm:$0xf]
      %v1896 = vld [vmem:[%s2 + $0x20] sm:$0xf]
      %v1897 = vld [vmem:[%s2 + $0x24] sm:$0xf]
      %v1898 = vld [vmem:[%s2 + $0x28] sm:$0xf]
      %v1899 = vld [vmem:[%s2 + $0x2c] sm:$0xf]
      %v1900 = vld [vmem:[%s2 + $0x30] sm:$0xf]
      %v1901 = vld [vmem:[%s2 + $0x34] sm:$0x3]
      %v1902 = vld [vmem:[%s3] sm:$0x1]
      %v1904 = vlaneseq
      %v1905 = vshrl.u32 %v1904, 7
      %v1906 = vsub.s32 0, %v1905
      %v1907 = vrot.slane %v1902, %v1906
      %v1923 = vunpack.c.l.b16 %v1888
      %v1924 = vunpack.c.l.b16 %v1889
      %v1925 = vunpack.c.l.b16 %v1890
      %v1926 = vunpack.c.l.b16 %v1891
      %v1927 = vunpack.c.l.b16 %v1892
      %v1928 = vunpack.c.l.b16 %v1893
      %v1929 = vunpack.c.l.b16 %v1894
      %v1930 = vunpack.c.l.b16 %v1895
      %v1931 = vunpack.c.l.b16 %v1896
      %v1932 = vunpack.c.l.b16 %v1897
      %v1933 = vunpack.c.l.b16 %v1898
      %v1934 = vunpack.c.l.b16 %v1899
      %v1935 = vunpack.c.l.b16 %v1900
      %v1936 = vunpack.c.l.b16 %v1901
      %v1937 = vpack.c.b16 %v1924, %v1923
      %v1938 = vpack.c.b16 %v1926, %v1925
      %v1939 = vpack.c.b16 %v1928, %v1927
      %v1940 = vpack.c.b16 %v1930, %v1929
      %v1941 = vpack.c.b16 %v1932, %v1931
      %v1942 = vpack.c.b16 %v1934, %v1933
      %v1943 = vpack.c.b16 %v1936, %v1935
      %vm1950 = vcmask 883712
      %v1952 = vsel %vm1950, %v1872, 0
      %v1955 = vsel %vm1950, %v1873, 0
      %v1958 = vsel %vm1950, %v1874, 0
      %v1961 = vsel %vm1950, %v1875, 0
      %v1964 = vsel %vm1950, %v1876, 0
      %v1967 = vsel %vm1950, %v1877, 0
      %v1970 = vsel %vm1950, %v1878, 0
      %v1973 = vsel %vm1950, %v1879, 0
      %v1976 = vsel %vm1950, %v1880, 0
      %v1979 = vsel %vm1950, %v1881, 0
      %v1982 = vsel %vm1950, %v1882, 0
      %v1985 = vsel %vm1950, %v1883, 0
      %v1988 = vsel %vm1950, %v1884, 0
      %v1991 = vsel %vm1950, %v1885, 0
      %v1994 = vsel %vm1950, %v1886, 0
      %v1997 = vsel %vm1950, %v1887, 0
      %v2000 = vsel %vm734, %v1943, 0
      %2002 = vmatprep.subr.bf16.mxu0 0
      %2003 = vmatpush1.bf16.msra.mxu0 %v1937
      %2004 = vmatprep.subr.bf16.mxu0 0
      %2005 = vmatpush1.bf16.msra.mxu0 %v1938
      %2006 = vmatprep.subr.bf16.mxu0 0
      %2007 = vmatpush1.bf16.msra.mxu0 %v1939
      %2008 = vmatprep.subr.bf16.mxu0 0
      %2009 = vmatpush1.bf16.msra.mxu0 %v1940
      %2010 = vmatprep.subr.bf16.mxu0 0
      %2011 = vmatpush1.bf16.msra.mxu0 %v1941
      %2012 = vmatprep.subr.bf16.mxu0 0
      %2013 = vmatpush1.bf16.msra.mxu0 %v1942
      %2014 = vmatprep.subr.bf16.mxu0 0
      %2015 = vmatpush1.bf16.msra.mxu0 %v2000
      %2016 = vmatprep.subr.bf16.mxu0 0
      %2017 = vmatpush1.bf16.msra.mxu0 0
      %2018 = vmatprep.subr.bf16.mxu0 0
      %2019 = vmatpush1.bf16.msra.mxu0 0
      %2020 = vmatprep.subr.bf16.mxu0 0
      %2021 = vmatpush1.bf16.msra.mxu0 0
      %2022 = vmatprep.subr.bf16.mxu0 0
      %2023 = vmatpush1.bf16.msra.mxu0 0
      %2024 = vmatprep.subr.bf16.mxu0 0
      %2025 = vmatpush1.bf16.msra.mxu0 0
      %2026 = vmatprep.subr.bf16.mxu0 0
      %2027 = vmatpush1.bf16.msra.mxu0 0
      %2028 = vmatprep.subr.bf16.mxu0 0
      %2029 = vmatpush1.bf16.msra.mxu0 0
      %2030 = vmatprep.subr.bf16.mxu0 0
      %2031 = vmatpush1.bf16.msra.mxu0 0
      %2032 = vmatprep.subr.bf16.mxu0 0
      %2033 = vmatpush1.bf16.msra.mxu0 0
      %2034 = vmatprep.mubr.bf16.mxu0 0
      %2035 = vmatmul.mubr.bf16.gmra.mrb[0].mxu0 %v1952
      %v2036 = vpop.f32.mrb[0].mxu0
      %v2037 = vadd.f32 %v1907, %v2036
      %v2038 = vpop.f32.mrb[0].mxu0
      %v2039 = vpop.f32.mrb[0].mxu0
      %v2040 = vadd.f32 %v1907, %v2039
      %v2041 = vpop.f32.mrb[0].mxu0
      %2042 = vmatprep.mubr.bf16.mxu0 0
      %2043 = vmatmul.mubr.bf16.gmra.mrb[0].mxu0 %v1955
      %v2044 = vpop.f32.mrb[0].mxu0
      %v2045 = vadd.f32 %v1907, %v2044
      %v2046 = vpop.f32.mrb[0].mxu0
      %v2047 = vpop.f32.mrb[0].mxu0
      %v2048 = vadd.f32 %v1907, %v2047
      %v2049 = vpop.f32.mrb[0].mxu0
      %2050 = vmatprep.mubr.bf16.mxu0 0
      %2051 = vmatmul.mubr.bf16.gmra.mrb[0].mxu0 %v1958
      %v2052 = vpop.f32.mrb[0].mxu0
      %v2053 = vadd.f32 %v1907, %v2052
      %v2054 = vpop.f32.mrb[0].mxu0
      %v2055 = vpop.f32.mrb[0].mxu0
      %v2056 = vadd.f32 %v1907, %v2055
      %v2057 = vpop.f32.mrb[0].mxu0
      %2058 = vmatprep.mubr.bf16.mxu0 0
      %2059 = vmatmul.mubr.bf16.gmra.mrb[0].mxu0 %v1961
      %v2060 = vpop.f32.mrb[0].mxu0
      %v2061 = vadd.f32 %v1907, %v2060
      %v2062 = vpop.f32.mrb[0].mxu0
      %v2063 = vpop.f32.mrb[0].mxu0
      %v2064 = vadd.f32 %v1907, %v2063
      %v2065 = vpop.f32.mrb[0].mxu0
      %2066 = vmatprep.mubr.bf16.mxu0 0
      %2067 = vmatmul.mubr.bf16.gmra.mrb[0].mxu0 %v1964
      %v2068 = vpop.f32.mrb[0].mxu0
      %v2069 = vadd.f32 %v1907, %v2068
      %v2070 = vpop.f32.mrb[0].mxu0
      %v2071 = vpop.f32.mrb[0].mxu0
      %v2072 = vadd.f32 %v1907, %v2071
      %v2073 = vpop.f32.mrb[0].mxu0
      %2074 = vmatprep.mubr.bf16.mxu0 0
      %2075 = vmatmul.mubr.bf16.gmra.mrb[0].mxu0 %v1967
      %v2076 = vpop.f32.mrb[0].mxu0
      %v2077 = vadd.f32 %v1907, %v2076
      %v2078 = vpop.f32.mrb[0].mxu0
      %v2079 = vpop.f32.mrb[0].mxu0
      %v2080 = vadd.f32 %v1907, %v2079
      %v2081 = vpop.f32.mrb[0].mxu0
      %2082 = vmatprep.mubr.bf16.mxu0 0
      %2083 = vmatmul.mubr.bf16.gmra.mrb[0].mxu0 %v1970
      %v2084 = vpop.f32.mrb[0].mxu0
      %v2085 = vadd.f32 %v1907, %v2084
      %v2086 = vpop.f32.mrb[0].mxu0
      %v2087 = vpop.f32.mrb[0].mxu0
      %v2088 = vadd.f32 %v1907, %v2087
      %v2089 = vpop.f32.mrb[0].mxu0
      %2090 = vmatprep.mubr.bf16.mxu0 0
      %2091 = vmatmul.mubr.bf16.gmra.mrb[0].mxu0 %v1973
      %v2092 = vpop.f32.mrb[0].mxu0
      %v2093 = vadd.f32 %v1907, %v2092
      %v2094 = vpop.f32.mrb[0].mxu0
      %v2095 = vpop.f32.mrb[0].mxu0
      %v2096 = vadd.f32 %v1907, %v2095
      %v2097 = vpop.f32.mrb[0].mxu0
      %2098 = vmatprep.mubr.bf16.mxu0 0
      %2099 = vmatmul.mubr.bf16.gmra.mrb[0].mxu0 %v1976
      %v2100 = vpop.f32.mrb[0].mxu0
      %v2101 = vadd.f32 %v1907, %v2100
      %v2102 = vpop.f32.mrb[0].mxu0
      %v2103 = vpop.f32.mrb[0].mxu0
      %v2104 = vadd.f32 %v1907, %v2103
      %v2105 = vpop.f32.mrb[0].mxu0
      %2106 = vmatprep.mubr.bf16.mxu0 0
      %2107 = vmatmul.mubr.bf16.gmra.mrb[0].mxu0 %v1979
      %v2108 = vpop.f32.mrb[0].mxu0
      %v2109 = vadd.f32 %v1907, %v2108
      %v2110 = vpop.f32.mrb[0].mxu0
      %v2111 = vpop.f32.mrb[0].mxu0
      %v2112 = vadd.f32 %v1907, %v2111
      %v2113 = vpop.f32.mrb[0].mxu0
      %2114 = vmatprep.mubr.bf16.mxu0 0
      %2115 = vmatmul.mubr.bf16.gmra.mrb[0].mxu0 %v1982
      %v2116 = vpop.f32.mrb[0].mxu0
      %v2117 = vadd.f32 %v1907, %v2116
      %v2118 = vpop.f32.mrb[0].mxu0
      %v2119 = vpop.f32.mrb[0].mxu0
      %v2120 = vadd.f32 %v1907, %v2119
      %v2121 = vpop.f32.mrb[0].mxu0
      %2122 = vmatprep.mubr.bf16.mxu0 0
      %2123 = vmatmul.mubr.bf16.gmra.mrb[0].mxu0 %v1985
      %v2124 = vpop.f32.mrb[0].mxu0
      %v2125 = vadd.f32 %v1907, %v2124
      %v2126 = vpop.f32.mrb[0].mxu0
      %v2127 = vpop.f32.mrb[0].mxu0
      %v2128 = vadd.f32 %v1907, %v2127
      %v2129 = vpop.f32.mrb[0].mxu0
      %2130 = vmatprep.mubr.bf16.mxu0 0
      %2131 = vmatmul.mubr.bf16.gmra.mrb[0].mxu0 %v1988
      %v2132 = vpop.f32.mrb[0].mxu0
      %v2133 = vadd.f32 %v1907, %v2132
      %v2134 = vpop.f32.mrb[0].mxu0
      %v2135 = vpop.f32.mrb[0].mxu0
      %v2136 = vadd.f32 %v1907, %v2135
      %v2137 = vpop.f32.mrb[0].mxu0
      %2138 = vmatprep.mubr.bf16.mxu0 0
      %2139 = vmatmul.mubr.bf16.gmra.mrb[0].mxu0 %v1991
      %v2140 = vpop.f32.mrb[0].mxu0
      %v2141 = vadd.f32 %v1907, %v2140
      %v2142 = vpop.f32.mrb[0].mxu0
      %v2143 = vpop.f32.mrb[0].mxu0
      %v2144 = vadd.f32 %v1907, %v2143
      %v2145 = vpop.f32.mrb[0].mxu0
      %2146 = vmatprep.mubr.bf16.mxu0 0
      %2147 = vmatmul.mubr.bf16.gmra.mrb[0].mxu0 %v1994
      %v2148 = vpop.f32.mrb[0].mxu0
      %v2149 = vadd.f32 %v1907, %v2148
      %v2150 = vpop.f32.mrb[0].mxu0
      %v2151 = vpop.f32.mrb[0].mxu0
      %v2152 = vadd.f32 %v1907, %v2151
      %v2153 = vpop.f32.mrb[0].mxu0
      %2154 = vmatprep.mubr.bf16.mxu0 0
      %2155 = vmatmul.mubr.bf16.gmra.mrb[0].mxu0 %v1997
      %v2156 = vpop.f32.mrb[0].mxu0
      %v2157 = vadd.f32 %v1907, %v2156
      %v2158 = vpop.f32.mrb[0].mxu0
      %v2159 = vpop.f32.mrb[0].mxu0
      %v2160 = vadd.f32 %v1907, %v2159
      %v2161 = vpop.f32.mrb[0].mxu0
      %2162 = vdwg.mxu0
      %v2163 = vmax.f32 %v2037, 0.0
      %v2164 = vmax.f32 %v2040, 0.0
      %v2165 = vmax.f32 %v2045, 0.0
      %v2166 = vmax.f32 %v2048, 0.0
      %v2167 = vmax.f32 %v2053, 0.0
      %v2168 = vmax.f32 %v2056, 0.0
      %v2169 = vmax.f32 %v2061, 0.0
      %v2170 = vmax.f32 %v2064, 0.0
      %v2171 = vmax.f32 %v2069, 0.0
      %v2172 = vmax.f32 %v2072, 0.0
      %v2173 = vmax.f32 %v2077, 0.0
      %v2174 = vmax.f32 %v2080, 0.0
      %v2175 = vmax.f32 %v2085, 0.0
      %v2176 = vmax.f32 %v2088, 0.0
      %v2177 = vmax.f32 %v2093, 0.0
      %v2178 = vmax.f32 %v2096, 0.0
      %v2179 = vmax.f32 %v2101, 0.0
      %v2180 = vmax.f32 %v2104, 0.0
      %v2181 = vmax.f32 %v2109, 0.0
      %v2182 = vmax.f32 %v2112, 0.0
      %v2183 = vmax.f32 %v2117, 0.0
      %v2184 = vmax.f32 %v2120, 0.0
      %v2185 = vmax.f32 %v2125, 0.0
      %v2186 = vmax.f32 %v2128, 0.0
      %v2187 = vmax.f32 %v2133, 0.0
      %v2188 = vmax.f32 %v2136, 0.0
      %v2189 = vmax.f32 %v2141, 0.0
      %v2190 = vmax.f32 %v2144, 0.0
      %v2191 = vmax.f32 %v2149, 0.0
      %v2192 = vmax.f32 %v2152, 0.0
      %v2193 = vmax.f32 %v2157, 0.0
      %v2194 = vmax.f32 %v2160, 0.0
      %s2195 = scalar_lea.vmem [#allocation3], 24
      %vm2196 = vcmask 523264
      %2197 = vst.msk [vmem:[%s2195 + $0x1] sm:$0xff] %vm2196, %v2163
      %2198 = vst.msk [vmem:[%s2195 + $0x9] sm:$0xff] %vm2196, %v2164
      %2199 = vst.msk [vmem:[%s2195 + $0x19] sm:$0xff] %vm2196, %v2165
      %2200 = vst.msk [vmem:[%s2195 + $0x21] sm:$0xff] %vm2196, %v2166
      %2201 = vst.msk [vmem:[%s2195 + $0x31] sm:$0xff] %vm2196, %v2167
      %2202 = vst.msk [vmem:[%s2195 + $0x39] sm:$0xff] %vm2196, %v2168
      %2203 = vst.msk [vmem:[%s2195 + $0x49] sm:$0xff] %vm2196, %v2169
      %2204 = vst.msk [vmem:[%s2195 + $0x51] sm:$0xff] %vm2196, %v2170
      %2205 = vst.msk [vmem:[%s2195 + $0x61] sm:$0xff] %vm2196, %v2171
      %2206 = vst.msk [vmem:[%s2195 + $0x69] sm:$0xff] %vm2196, %v2172
      %2207 = vst.msk [vmem:[%s2195 + $0x79] sm:$0xff] %vm2196, %v2173
      %2208 = vst.msk [vmem:[%s2195 + $0x81] sm:$0xff] %vm2196, %v2174
      %2209 = vst.msk [vmem:[%s2195 + $0x91] sm:$0xff] %vm2196, %v2175
      %2210 = vst.msk [vmem:[%s2195 + $0x99] sm:$0xff] %vm2196, %v2176
      %2211 = vst.msk [vmem:[%s2195 + $0xa9] sm:$0xff] %vm2196, %v2177
      %2212 = vst.msk [vmem:[%s2195 + $0xb1] sm:$0xff] %vm2196, %v2178
      %2213 = vst.msk [vmem:[%s2195 + $0xc1] sm:$0xff] %vm2196, %v2179
      %2214 = vst.msk [vmem:[%s2195 + $0xc9] sm:$0xff] %vm2196, %v2180
      %2215 = vst.msk [vmem:[%s2195 + $0xd9] sm:$0xff] %vm2196, %v2181
      %2216 = vst.msk [vmem:[%s2195 + $0xe1] sm:$0xff] %vm2196, %v2182
      %2217 = vst.msk [vmem:[%s2195 + $0xf1] sm:$0xff] %vm2196, %v2183
      %2218 = vst.msk [vmem:[%s2195 + $0xf9] sm:$0xff] %vm2196, %v2184
      %2219 = vst.msk [vmem:[%s2195 + $0x109] sm:$0xff] %vm2196, %v2185
      %2220 = vst.msk [vmem:[%s2195 + $0x111] sm:$0xff] %vm2196, %v2186
      %2221 = vst.msk [vmem:[%s2195 + $0x121] sm:$0xff] %vm2196, %v2187
      %2222 = vst.msk [vmem:[%s2195 + $0x129] sm:$0xff] %vm2196, %v2188
      %2223 = vst.msk [vmem:[%s2195 + $0x139] sm:$0xff] %vm2196, %v2189
      %2224 = vst.msk [vmem:[%s2195 + $0x141] sm:$0xff] %vm2196, %v2190
      %2225 = vst.msk [vmem:[%s2195 + $0x151] sm:$0xff] %vm2196, %v2191
      %2226 = vst.msk [vmem:[%s2195 + $0x159] sm:$0xff] %vm2196, %v2192
      %2227 = vst.msk [vmem:[%s2195 + $0x169] sm:$0xff] %vm2196, %v2193
      %2228 = vst.msk [vmem:[%s2195 + $0x171] sm:$0xff] %vm2196, %v2194
      %2229 = vst.msk [vmem:[#allocation3] sm:$0xff] %vm2196, 0.0
      %2230 = vst.msk [vmem:[#allocation3 + $0x8] sm:$0xff] %vm2196, 0.0
      %vm2231 = vcmask 517120
      %2232 = vst.msk [vmem:[#allocation3 + $0x10] sm:$0x3] %vm2231, 0.0
      %s2233 = scalar_lea.vmem [#allocation3], 408
      %2234 = vst.msk [vmem:[%s2233] sm:$0xff] %vm2196, 0.0
      %2235 = vst.msk [vmem:[%s2233 + $0x8] sm:$0xff] %vm2196, 0.0
      %2236 = vst.msk [vmem:[%s2233 + $0x10] sm:$0x3] %vm2231, 0.0
      %vm2237 = vcmask 516096
      %2238 = vst.msk [vmem:[#allocation3] sm:$0x1] %vm2237, 0.0
      %2239 = vst.msk [vmem:[#allocation3 + $0x18] sm:$0x1] %vm2237, 0.0
      %2240 = vst.msk [vmem:[#allocation3 + $0x30] sm:$0x1] %vm2237, 0.0
      %2241 = vst.msk [vmem:[#allocation3 + $0x48] sm:$0x1] %vm2237, 0.0
      %2242 = vst.msk [vmem:[#allocation3 + $0x60] sm:$0x1] %vm2237, 0.0
      %2243 = vst.msk [vmem:[#allocation3 + $0x78] sm:$0x1] %vm2237, 0.0
      %2244 = vst.msk [vmem:[#allocation3 + $0x90] sm:$0x1] %vm2237, 0.0
      %2245 = vst.msk [vmem:[#allocation3 + $0xa8] sm:$0x1] %vm2237, 0.0
      %2246 = vst.msk [vmem:[#allocation3 + $0xc0] sm:$0x1] %vm2237, 0.0
      %2247 = vst.msk [vmem:[#allocation3 + $0xd8] sm:$0x1] %vm2237, 0.0
      %2248 = vst.msk [vmem:[#allocation3 + $0xf0] sm:$0x1] %vm2237, 0.0
      %2249 = vst.msk [vmem:[#allocation3 + $0x108] sm:$0x1] %vm2237, 0.0
      %2250 = vst.msk [vmem:[#allocation3 + $0x120] sm:$0x1] %vm2237, 0.0
      %2251 = vst.msk [vmem:[#allocation3 + $0x138] sm:$0x1] %vm2237, 0.0
      %2252 = vst.msk [vmem:[#allocation3 + $0x150] sm:$0x1] %vm2237, 0.0
      %2253 = vst.msk [vmem:[#allocation3 + $0x168] sm:$0x1] %vm2237, 0.0
      %2254 = vst.msk [vmem:[#allocation3 + $0x180] sm:$0x1] %vm2237, 0.0
      %2255 = vst.msk [vmem:[#allocation3 + $0x198] sm:$0x1] %vm2237, 0.0
      %2256 = vst.msk [vmem:[#allocation3 + $0x11] sm:$0x1] %vm2237, 0.0
      %2257 = vst.msk [vmem:[#allocation3 + $0x29] sm:$0x1] %vm2237, 0.0
      %2258 = vst.msk [vmem:[#allocation3 + $0x41] sm:$0x1] %vm2237, 0.0
      %2259 = vst.msk [vmem:[#allocation3 + $0x59] sm:$0x1] %vm2237, 0.0
      %2260 = vst.msk [vmem:[#allocation3 + $0x71] sm:$0x1] %vm2237, 0.0
      %2261 = vst.msk [vmem:[#allocation3 + $0x89] sm:$0x1] %vm2237, 0.0
      %2262 = vst.msk [vmem:[#allocation3 + $0xa1] sm:$0x1] %vm2237, 0.0
      %2263 = vst.msk [vmem:[#allocation3 + $0xb9] sm:$0x1] %vm2237, 0.0
      %2264 = vst.msk [vmem:[#allocation3 + $0xd1] sm:$0x1] %vm2237, 0.0
      %2265 = vst.msk [vmem:[#allocation3 + $0xe9] sm:$0x1] %vm2237, 0.0
      %2266 = vst.msk [vmem:[#allocation3 + $0x101] sm:$0x1] %vm2237, 0.0
      %2267 = vst.msk [vmem:[#allocation3 + $0x119] sm:$0x1] %vm2237, 0.0
      %2268 = vst.msk [vmem:[#allocation3 + $0x131] sm:$0x1] %vm2237, 0.0
      %2269 = vst.msk [vmem:[#allocation3 + $0x149] sm:$0x1] %vm2237, 0.0
      %2270 = vst.msk [vmem:[#allocation3 + $0x161] sm:$0x1] %vm2237, 0.0
      %2271 = vst.msk [vmem:[#allocation3 + $0x179] sm:$0x1] %vm2237, 0.0
      %2272 = vst.msk [vmem:[#allocation3 + $0x191] sm:$0x1] %vm2237, 0.0
      %2273 = vst.msk [vmem:[#allocation3 + $0x1a9] sm:$0x1] %vm2237, 0.0
      %v2274 = vld [vmem:[#allocation3] sm:$0xff]
      %v2275 = vld [vmem:[#allocation3 + $0x8] sm:$0xff]
      %v2276 = vld [vmem:[#allocation3 + $0x10] sm:$0x3]
      %v2277 = vld [vmem:[#allocation3 + $0x18] sm:$0xff]
      %v2278 = vld [vmem:[#allocation3 + $0x20] sm:$0xff]
      %v2279 = vld [vmem:[#allocation3 + $0x28] sm:$0x3]
      %v2280 = vld [vmem:[#allocation3 + $0x30] sm:$0xff]
      %v2281 = vld [vmem:[#allocation3 + $0x38] sm:$0xff]
      %v2282 = vld [vmem:[#allocation3 + $0x40] sm:$0x3]
      %v2283 = vld [vmem:[#allocation3 + $0x48] sm:$0xff]
      %v2284 = vld [vmem:[#allocation3 + $0x50] sm:$0xff]
      %v2285 = vld [vmem:[#allocation3 + $0x58] sm:$0x3]
      %v2286 = vld [vmem:[#allocation3 + $0x60] sm:$0xff]
      %v2287 = vld [vmem:[#allocation3 + $0x68] sm:$0xff]
      %v2288 = vld [vmem:[#allocation3 + $0x70] sm:$0x3]
      %v2289 = vld [vmem:[#allocation3 + $0x78] sm:$0xff]
      %v2290 = vld [vmem:[#allocation3 + $0x80] sm:$0xff]
      %v2291 = vld [vmem:[#allocation3 + $0x88] sm:$0x3]
      %v2292 = vld [vmem:[#allocation3 + $0x90] sm:$0xff]
      %v2293 = vld [vmem:[#allocation3 + $0x98] sm:$0xff]
      %v2294 = vld [vmem:[#allocation3 + $0xa0] sm:$0x3]
      %v2295 = vld [vmem:[#allocation3 + $0xa8] sm:$0xff]
      %v2296 = vld [vmem:[#allocation3 + $0xb0] sm:$0xff]
      %v2297 = vld [vmem:[#allocation3 + $0xb8] sm:$0x3]
      %v2298 = vld [vmem:[#allocation3 + $0xc0] sm:$0xff]
      %v2299 = vld [vmem:[#allocation3 + $0xc8] sm:$0xff]
      %v2300 = vld [vmem:[#allocation3 + $0xd0] sm:$0x3]
      %v2301 = vld [vmem:[#allocation3 + $0xd8] sm:$0xff]
      %v2302 = vld [vmem:[#allocation3 + $0xe0] sm:$0xff]
      %v2303 = vld [vmem:[#allocation3 + $0xe8] sm:$0x3]
      %v2304 = vld [vmem:[#allocation3 + $0xf0] sm:$0xff]
      %v2305 = vld [vmem:[#allocation3 + $0xf8] sm:$0xff]
      %v2306 = vld [vmem:[#allocation3 + $0x100] sm:$0x3]
      %v2307 = vld [vmem:[#allocation3 + $0x108] sm:$0xff]
      %v2308 = vld [vmem:[#allocation3 + $0x110] sm:$0xff]
      %v2309 = vld [vmem:[#allocation3 + $0x118] sm:$0x3]
      %v2310 = vld [vmem:[#allocation3 + $0x120] sm:$0xff]
      %v2311 = vld [vmem:[#allocation3 + $0x128] sm:$0xff]
      %v2312 = vld [vmem:[#allocation3 + $0x130] sm:$0x3]
      %v2313 = vld [vmem:[#allocation3 + $0x138] sm:$0xff]
      %v2314 = vld [vmem:[#allocation3 + $0x140] sm:$0xff]
      %v2315 = vld [vmem:[#allocation3 + $0x148] sm:$0x3]
      %v2316 = vld [vmem:[#allocation3 + $0x150] sm:$0xff]
      %v2317 = vld [vmem:[#allocation3 + $0x158] sm:$0xff]
      %v2318 = vld [vmem:[#allocation3 + $0x160] sm:$0x3]
      %v2319 = vld [vmem:[#allocation3 + $0x168] sm:$0xff]
      %v2320 = vld [vmem:[#allocation3 + $0x170] sm:$0xff]
      %v2321 = vld [vmem:[#allocation3 + $0x178] sm:$0x3]
      %v2322 = vld [vmem:[#allocation3 + $0x180] sm:$0xff]
      %v2323 = vld [vmem:[#allocation3 + $0x188] sm:$0xff]
      %v2324 = vld [vmem:[#allocation3 + $0x190] sm:$0x3]
      %v2325 = vld [vmem:[#allocation3 + $0x198] sm:$0xff]
      %v2326 = vld [vmem:[#allocation3 + $0x1a0] sm:$0xff]
      %v2327 = vld [vmem:[#allocation3 + $0x1a8] sm:$0x3]
      %v2376 = vrot.slane %v2274, 1
      %v2377 = vrot.slane %v2275, 1
      %v2378 = vsel %vm653, %v2376, %v2377
      %v2379 = vrot.slane %v2276, 1
      %v2380 = vsel %vm653, %v2377, %v2379
      %v2381 = vrot.slane %v2277, 1
      %v2382 = vrot.slane %v2278, 1
      %v2383 = vsel %vm653, %v2381, %v2382
      %v2384 = vrot.slane %v2279, 1
      %v2385 = vsel %vm653, %v2382, %v2384
      %v2386 = vrot.slane %v2280, 1
      %v2387 = vrot.slane %v2281, 1
      %v2388 = vsel %vm653, %v2386, %v2387
      %v2389 = vrot.slane %v2282, 1
      %v2390 = vsel %vm653, %v2387, %v2389
      %v2391 = vrot.slane %v2283, 1
      %v2392 = vrot.slane %v2284, 1
      %v2393 = vsel %vm653, %v2391, %v2392
      %v2394 = vrot.slane %v2285, 1
      %v2395 = vsel %vm653, %v2392, %v2394
      %v2396 = vrot.slane %v2286, 1
      %v2397 = vrot.slane %v2287, 1
      %v2398 = vsel %vm653, %v2396, %v2397
      %v2399 = vrot.slane %v2288, 1
      %v2400 = vsel %vm653, %v2397, %v2399
      %v2401 = vrot.slane %v2289, 1
      %v2402 = vrot.slane %v2290, 1
      %v2403 = vsel %vm653, %v2401, %v2402
      %v2404 = vrot.slane %v2291, 1
      %v2405 = vsel %vm653, %v2402, %v2404
      %v2406 = vrot.slane %v2292, 1
      %v2407 = vrot.slane %v2293, 1
      %v2408 = vsel %vm653, %v2406, %v2407
      %v2409 = vrot.slane %v2294, 1
      %v2410 = vsel %vm653, %v2407, %v2409
      %v2411 = vrot.slane %v2295, 1
      %v2412 = vrot.slane %v2296, 1
      %v2413 = vsel %vm653, %v2411, %v2412
      %v2414 = vrot.slane %v2297, 1
      %v2415 = vsel %vm653, %v2412, %v2414
      %v2416 = vrot.slane %v2298, 1
      %v2417 = vrot.slane %v2299, 1
      %v2418 = vsel %vm653, %v2416, %v2417
      %v2419 = vrot.slane %v2300, 1
      %v2420 = vsel %vm653, %v2417, %v2419
      %v2421 = vrot.slane %v2301, 1
      %v2422 = vrot.slane %v2302, 1
      %v2423 = vsel %vm653, %v2421, %v2422
      %v2424 = vrot.slane %v2303, 1
      %v2425 = vsel %vm653, %v2422, %v2424
      %v2426 = vrot.slane %v2304, 1
      %v2427 = vrot.slane %v2305, 1
      %v2428 = vsel %vm653, %v2426, %v2427
      %v2429 = vrot.slane %v2306, 1
      %v2430 = vsel %vm653, %v2427, %v2429
      %v2431 = vrot.slane %v2307, 1
      %v2432 = vrot.slane %v2308, 1
      %v2433 = vsel %vm653, %v2431, %v2432
      %v2434 = vrot.slane %v2309, 1
      %v2435 = vsel %vm653, %v2432, %v2434
      %v2436 = vrot.slane %v2310, 1
      %v2437 = vrot.slane %v2311, 1
      %v2438 = vsel %vm653, %v2436, %v2437
      %v2439 = vrot.slane %v2312, 1
      %v2440 = vsel %vm653, %v2437, %v2439
      %v2441 = vrot.slane %v2313, 1
      %v2442 = vrot.slane %v2314, 1
      %v2443 = vsel %vm653, %v2441, %v2442
      %v2444 = vrot.slane %v2315, 1
      %v2445 = vsel %vm653, %v2442, %v2444
      %v2446 = vrot.slane %v2316, 1
      %v2447 = vrot.slane %v2317, 1
      %v2448 = vsel %vm653, %v2446, %v2447
      %v2449 = vrot.slane %v2318, 1
      %v2450 = vsel %vm653, %v2447, %v2449
      %v2451 = vrot.slane %v2319, 1
      %v2452 = vrot.slane %v2320, 1
      %v2453 = vsel %vm653, %v2451, %v2452
      %v2454 = vrot.slane %v2321, 1
      %v2455 = vsel %vm653, %v2452, %v2454
      %v2456 = vrot.slane %v2274, 2
      %v2457 = vrot.slane %v2275, 2
      %v2458 = vsel %vm734, %v2456, %v2457
      %v2459 = vrot.slane %v2276, 2
      %v2460 = vsel %vm734, %v2457, %v2459
      %v2461 = vrot.slane %v2277, 2
      %v2462 = vrot.slane %v2278, 2
      %v2463 = vsel %vm734, %v2461, %v2462
      %v2464 = vrot.slane %v2279, 2
      %v2465 = vsel %vm734, %v2462, %v2464
      %v2466 = vrot.slane %v2280, 2
      %v2467 = vrot.slane %v2281, 2
      %v2468 = vsel %vm734, %v2466, %v2467
      %v2469 = vrot.slane %v2282, 2
      %v2470 = vsel %vm734, %v2467, %v2469
      %v2471 = vrot.slane %v2283, 2
      %v2472 = vrot.slane %v2284, 2
      %v2473 = vsel %vm734, %v2471, %v2472
      %v2474 = vrot.slane %v2285, 2
      %v2475 = vsel %vm734, %v2472, %v2474
      %v2476 = vrot.slane %v2286, 2
      %v2477 = vrot.slane %v2287, 2
      %v2478 = vsel %vm734, %v2476, %v2477
      %v2479 = vrot.slane %v2288, 2
      %v2480 = vsel %vm734, %v2477, %v2479
      %v2481 = vrot.slane %v2289, 2
      %v2482 = vrot.slane %v2290, 2
      %v2483 = vsel %vm734, %v2481, %v2482
      %v2484 = vrot.slane %v2291, 2
      %v2485 = vsel %vm734, %v2482, %v2484
      %v2486 = vrot.slane %v2292, 2
      %v2487 = vrot.slane %v2293, 2
      %v2488 = vsel %vm734, %v2486, %v2487
      %v2489 = vrot.slane %v2294, 2
      %v2490 = vsel %vm734, %v2487, %v2489
      %v2491 = vrot.slane %v2295, 2
      %v2492 = vrot.slane %v2296, 2
      %v2493 = vsel %vm734, %v2491, %v2492
      %v2494 = vrot.slane %v2297, 2
      %v2495 = vsel %vm734, %v2492, %v2494
      %v2496 = vrot.slane %v2298, 2
      %v2497 = vrot.slane %v2299, 2
      %v2498 = vsel %vm734, %v2496, %v2497
      %v2499 = vrot.slane %v2300, 2
      %v2500 = vsel %vm734, %v2497, %v2499
      %v2501 = vrot.slane %v2301, 2
      %v2502 = vrot.slane %v2302, 2
      %v2503 = vsel %vm734, %v2501, %v2502
      %v2504 = vrot.slane %v2303, 2
      %v2505 = vsel %vm734, %v2502, %v2504
      %v2506 = vrot.slane %v2304, 2
      %v2507 = vrot.slane %v2305, 2
      %v2508 = vsel %vm734, %v2506, %v2507
      %v2509 = vrot.slane %v2306, 2
      %v2510 = vsel %vm734, %v2507, %v2509
      %v2511 = vrot.slane %v2307, 2
      %v2512 = vrot.slane %v2308, 2
      %v2513 = vsel %vm734, %v2511, %v2512
      %v2514 = vrot.slane %v2309, 2
      %v2515 = vsel %vm734, %v2512, %v2514
      %v2516 = vrot.slane %v2310, 2
      %v2517 = vrot.slane %v2311, 2
      %v2518 = vsel %vm734, %v2516, %v2517
      %v2519 = vrot.slane %v2312, 2
      %v2520 = vsel %vm734, %v2517, %v2519
      %v2521 = vrot.slane %v2313, 2
      %v2522 = vrot.slane %v2314, 2
      %v2523 = vsel %vm734, %v2521, %v2522
      %v2524 = vrot.slane %v2315, 2
      %v2525 = vsel %vm734, %v2522, %v2524
      %v2526 = vrot.slane %v2316, 2
      %v2527 = vrot.slane %v2317, 2
      %v2528 = vsel %vm734, %v2526, %v2527
      %v2529 = vrot.slane %v2318, 2
      %v2530 = vsel %vm734, %v2527, %v2529
      %v2531 = vrot.slane %v2319, 2
      %v2532 = vrot.slane %v2320, 2
      %v2533 = vsel %vm734, %v2531, %v2532
      %v2534 = vrot.slane %v2321, 2
      %v2535 = vsel %vm734, %v2532, %v2534
      %v2571 = vrot.slane %v2322, 1
      %v2572 = vrot.slane %v2323, 1
      %v2573 = vsel %vm653, %v2571, %v2572
      %v2574 = vrot.slane %v2324, 1
      %v2575 = vsel %vm653, %v2572, %v2574
      %v2608 = vrot.slane %v2322, 2
      %v2609 = vrot.slane %v2323, 2
      %v2610 = vsel %vm734, %v2608, %v2609
      %v2611 = vrot.slane %v2324, 2
      %v2612 = vsel %vm734, %v2609, %v2611
      %v2616 = vrot.slane %v2325, 1
      %v2617 = vrot.slane %v2326, 1
      %v2618 = vsel %vm653, %v2616, %v2617
      %v2619 = vrot.slane %v2327, 1
      %v2620 = vsel %vm653, %v2617, %v2619
      %v2621 = vrot.slane %v2325, 2
      %v2622 = vrot.slane %v2326, 2
      %v2623 = vsel %vm734, %v2621, %v2622
      %v2624 = vrot.slane %v2327, 2
      %v2625 = vsel %vm734, %v2622, %v2624
      %2630 = vrot.lane.b32.xlu0 %v2378, 64
      %v2631 = vpop.permute.xlu0 %2630
      %2632 = vrot.lane.b32.xlu0 %v2380, 64
      %v2633 = vpop.permute.xlu0 %2632
      %2634 = vrot.lane.b32.xlu0 %v2383, 64
      %v2635 = vpop.permute.xlu0 %2634
      %2636 = vrot.lane.b32.xlu0 %v2385, 64
      %v2637 = vpop.permute.xlu0 %2636
      %2638 = vrot.lane.b32.xlu0 %v2388, 64
      %v2639 = vpop.permute.xlu0 %2638
      %2640 = vrot.lane.b32.xlu0 %v2390, 64
      %v2641 = vpop.permute.xlu0 %2640
      %2642 = vrot.lane.b32.xlu0 %v2393, 64
      %v2643 = vpop.permute.xlu0 %2642
      %2644 = vrot.lane.b32.xlu0 %v2395, 64
      %v2645 = vpop.permute.xlu0 %2644
      %2646 = vrot.lane.b32.xlu0 %v2398, 64
      %v2647 = vpop.permute.xlu0 %2646
      %2648 = vrot.lane.b32.xlu0 %v2400, 64
      %v2649 = vpop.permute.xlu0 %2648
      %2650 = vrot.lane.b32.xlu0 %v2403, 64
      %v2651 = vpop.permute.xlu0 %2650
      %2652 = vrot.lane.b32.xlu0 %v2405, 64
      %v2653 = vpop.permute.xlu0 %2652
      %2654 = vrot.lane.b32.xlu0 %v2408, 64
      %v2655 = vpop.permute.xlu0 %2654
      %2656 = vrot.lane.b32.xlu0 %v2410, 64
      %v2657 = vpop.permute.xlu0 %2656
      %2658 = vrot.lane.b32.xlu0 %v2413, 64
      %v2659 = vpop.permute.xlu0 %2658
      %2660 = vrot.lane.b32.xlu0 %v2415, 64
      %v2661 = vpop.permute.xlu0 %2660
      %2662 = vrot.lane.b32.xlu0 %v2418, 64
      %v2663 = vpop.permute.xlu0 %2662
      %2664 = vrot.lane.b32.xlu0 %v2420, 64
      %v2665 = vpop.permute.xlu0 %2664
      %2666 = vrot.lane.b32.xlu0 %v2423, 64
      %v2667 = vpop.permute.xlu0 %2666
      %2668 = vrot.lane.b32.xlu0 %v2425, 64
      %v2669 = vpop.permute.xlu0 %2668
      %2670 = vrot.lane.b32.xlu0 %v2428, 64
      %v2671 = vpop.permute.xlu0 %2670
      %2672 = vrot.lane.b32.xlu0 %v2430, 64
      %v2673 = vpop.permute.xlu0 %2672
      %2674 = vrot.lane.b32.xlu0 %v2433, 64
      %v2675 = vpop.permute.xlu0 %2674
      %2676 = vrot.lane.b32.xlu0 %v2435, 64
      %v2677 = vpop.permute.xlu0 %2676
      %2678 = vrot.lane.b32.xlu0 %v2438, 64
      %v2679 = vpop.permute.xlu0 %2678
      %2680 = vrot.lane.b32.xlu0 %v2440, 64
      %v2681 = vpop.permute.xlu0 %2680
      %2682 = vrot.lane.b32.xlu0 %v2443, 64
      %v2683 = vpop.permute.xlu0 %2682
      %2684 = vrot.lane.b32.xlu0 %v2445, 64
      %v2685 = vpop.permute.xlu0 %2684
      %2686 = vrot.lane.b32.xlu0 %v2448, 64
      %v2687 = vpop.permute.xlu0 %2686
      %2688 = vrot.lane.b32.xlu0 %v2450, 64
      %v2689 = vpop.permute.xlu0 %2688
      %2690 = vrot.lane.b32.xlu0 %v2453, 64
      %v2691 = vpop.permute.xlu0 %2690
      %2692 = vrot.lane.b32.xlu0 %v2455, 64
      %v2693 = vpop.permute.xlu0 %2692
      %2726 = vrot.lane.b32.xlu0 %v2277, 64
      %v2727 = vpop.permute.xlu0 %2726
      %2728 = vrot.lane.b32.xlu0 %v2278, 64
      %v2729 = vpop.permute.xlu0 %2728
      %2730 = vrot.lane.b32.xlu0 %v2280, 64
      %v2731 = vpop.permute.xlu0 %2730
      %2732 = vrot.lane.b32.xlu0 %v2281, 64
      %v2733 = vpop.permute.xlu0 %2732
      %2734 = vrot.lane.b32.xlu0 %v2283, 64
      %v2735 = vpop.permute.xlu0 %2734
      %2736 = vrot.lane.b32.xlu0 %v2284, 64
      %v2737 = vpop.permute.xlu0 %2736
      %2738 = vrot.lane.b32.xlu0 %v2286, 64
      %v2739 = vpop.permute.xlu0 %2738
      %2740 = vrot.lane.b32.xlu0 %v2287, 64
      %v2741 = vpop.permute.xlu0 %2740
      %2742 = vrot.lane.b32.xlu0 %v2289, 64
      %v2743 = vpop.permute.xlu0 %2742
      %2744 = vrot.lane.b32.xlu0 %v2290, 64
      %v2745 = vpop.permute.xlu0 %2744
      %2746 = vrot.lane.b32.xlu0 %v2292, 64
      %v2747 = vpop.permute.xlu0 %2746
      %2748 = vrot.lane.b32.xlu0 %v2293, 64
      %v2749 = vpop.permute.xlu0 %2748
      %2750 = vrot.lane.b32.xlu0 %v2295, 64
      %v2751 = vpop.permute.xlu0 %2750
      %2752 = vrot.lane.b32.xlu0 %v2296, 64
      %v2753 = vpop.permute.xlu0 %2752
      %2754 = vrot.lane.b32.xlu0 %v2298, 64
      %v2755 = vpop.permute.xlu0 %2754
      %2756 = vrot.lane.b32.xlu0 %v2299, 64
      %v2757 = vpop.permute.xlu0 %2756
      %2758 = vrot.lane.b32.xlu0 %v2301, 64
      %v2759 = vpop.permute.xlu0 %2758
      %2760 = vrot.lane.b32.xlu0 %v2302, 64
      %v2761 = vpop.permute.xlu0 %2760
      %2762 = vrot.lane.b32.xlu0 %v2304, 64
      %v2763 = vpop.permute.xlu0 %2762
      %2764 = vrot.lane.b32.xlu0 %v2305, 64
      %v2765 = vpop.permute.xlu0 %2764
      %2766 = vrot.lane.b32.xlu0 %v2307, 64
      %v2767 = vpop.permute.xlu0 %2766
      %2768 = vrot.lane.b32.xlu0 %v2308, 64
      %v2769 = vpop.permute.xlu0 %2768
      %2770 = vrot.lane.b32.xlu0 %v2310, 64
      %v2771 = vpop.permute.xlu0 %2770
      %2772 = vrot.lane.b32.xlu0 %v2311, 64
      %v2773 = vpop.permute.xlu0 %2772
      %2774 = vrot.lane.b32.xlu0 %v2313, 64
      %v2775 = vpop.permute.xlu0 %2774
      %2776 = vrot.lane.b32.xlu0 %v2314, 64
      %v2777 = vpop.permute.xlu0 %2776
      %2778 = vrot.lane.b32.xlu0 %v2316, 64
      %v2779 = vpop.permute.xlu0 %2778
      %2780 = vrot.lane.b32.xlu0 %v2317, 64
      %v2781 = vpop.permute.xlu0 %2780
      %2782 = vrot.lane.b32.xlu0 %v2319, 64
      %v2783 = vpop.permute.xlu0 %2782
      %2784 = vrot.lane.b32.xlu0 %v2320, 64
      %v2785 = vpop.permute.xlu0 %2784
      %2786 = vrot.lane.b32.xlu0 %v2322, 64
      %v2787 = vpop.permute.xlu0 %2786
      %2788 = vrot.lane.b32.xlu0 %v2323, 64
      %v2789 = vpop.permute.xlu0 %2788
      %2822 = vrot.lane.b32.xlu0 %v2463, 64
      %v2823 = vpop.permute.xlu0 %2822
      %2824 = vrot.lane.b32.xlu0 %v2465, 64
      %v2825 = vpop.permute.xlu0 %2824
      %2826 = vrot.lane.b32.xlu0 %v2468, 64
      %v2827 = vpop.permute.xlu0 %2826
      %2828 = vrot.lane.b32.xlu0 %v2470, 64
      %v2829 = vpop.permute.xlu0 %2828
      %2830 = vrot.lane.b32.xlu0 %v2473, 64
      %v2831 = vpop.permute.xlu0 %2830
      %2832 = vrot.lane.b32.xlu0 %v2475, 64
      %v2833 = vpop.permute.xlu0 %2832
      %2834 = vrot.lane.b32.xlu0 %v2478, 64
      %v2835 = vpop.permute.xlu0 %2834
      %2836 = vrot.lane.b32.xlu0 %v2480, 64
      %v2837 = vpop.permute.xlu0 %2836
      %2838 = vrot.lane.b32.xlu0 %v2483, 64
      %v2839 = vpop.permute.xlu0 %2838
      %2840 = vrot.lane.b32.xlu0 %v2485, 64
      %v2841 = vpop.permute.xlu0 %2840
      %2842 = vrot.lane.b32.xlu0 %v2488, 64
      %v2843 = vpop.permute.xlu0 %2842
      %2844 = vrot.lane.b32.xlu0 %v2490, 64
      %v2845 = vpop.permute.xlu0 %2844
      %2846 = vrot.lane.b32.xlu0 %v2493, 64
      %v2847 = vpop.permute.xlu0 %2846
      %2848 = vrot.lane.b32.xlu0 %v2495, 64
      %v2849 = vpop.permute.xlu0 %2848
      %2850 = vrot.lane.b32.xlu0 %v2498, 64
      %v2851 = vpop.permute.xlu0 %2850
      %2852 = vrot.lane.b32.xlu0 %v2500, 64
      %v2853 = vpop.permute.xlu0 %2852
      %2854 = vrot.lane.b32.xlu0 %v2503, 64
      %v2855 = vpop.permute.xlu0 %2854
      %2856 = vrot.lane.b32.xlu0 %v2505, 64
      %v2857 = vpop.permute.xlu0 %2856
      %2858 = vrot.lane.b32.xlu0 %v2508, 64
      %v2859 = vpop.permute.xlu0 %2858
      %2860 = vrot.lane.b32.xlu0 %v2510, 64
      %v2861 = vpop.permute.xlu0 %2860
      %2862 = vrot.lane.b32.xlu0 %v2513, 64
      %v2863 = vpop.permute.xlu0 %2862
      %2864 = vrot.lane.b32.xlu0 %v2515, 64
      %v2865 = vpop.permute.xlu0 %2864
      %2866 = vrot.lane.b32.xlu0 %v2518, 64
      %v2867 = vpop.permute.xlu0 %2866
      %2868 = vrot.lane.b32.xlu0 %v2520, 64
      %v2869 = vpop.permute.xlu0 %2868
      %2870 = vrot.lane.b32.xlu0 %v2523, 64
      %v2871 = vpop.permute.xlu0 %2870
      %2872 = vrot.lane.b32.xlu0 %v2525, 64
      %v2873 = vpop.permute.xlu0 %2872
      %2874 = vrot.lane.b32.xlu0 %v2528, 64
      %v2875 = vpop.permute.xlu0 %2874
      %2876 = vrot.lane.b32.xlu0 %v2530, 64
      %v2877 = vpop.permute.xlu0 %2876
      %2878 = vrot.lane.b32.xlu0 %v2533, 64
      %v2879 = vpop.permute.xlu0 %2878
      %2880 = vrot.lane.b32.xlu0 %v2535, 64
      %v2881 = vpop.permute.xlu0 %2880
      %2882 = vrot.lane.b32.xlu0 %v2610, 64
      %v2883 = vpop.permute.xlu0 %2882
      %2884 = vrot.lane.b32.xlu0 %v2612, 64
      %v2885 = vpop.permute.xlu0 %2884
      %2918 = vrot.lane.b32.xlu0 %v2573, 64
      %v2919 = vpop.permute.xlu0 %2918
      %2920 = vrot.lane.b32.xlu0 %v2575, 64
      %v2921 = vpop.permute.xlu0 %2920
      %2922 = vrot.lane.b32.xlu0 %v2618, 64
      %v2923 = vpop.permute.xlu0 %2922
      %2924 = vrot.lane.b32.xlu0 %v2620, 64
      %v2925 = vpop.permute.xlu0 %2924
      %v2930 = vsel %vm2196, %v2274, %v2631
      %v2931 = vsel %vm2196, %v2275, %v2633
      %v2932 = vsel %vm2196, %v2277, %v2635
      %v2933 = vsel %vm2196, %v2278, %v2637
      %v2934 = vsel %vm2196, %v2280, %v2639
      %v2935 = vsel %vm2196, %v2281, %v2641
      %v2936 = vsel %vm2196, %v2283, %v2643
      %v2937 = vsel %vm2196, %v2284, %v2645
      %v2938 = vsel %vm2196, %v2286, %v2647
      %v2939 = vsel %vm2196, %v2287, %v2649
      %v2940 = vsel %vm2196, %v2289, %v2651
      %v2941 = vsel %vm2196, %v2290, %v2653
      %v2942 = vsel %vm2196, %v2292, %v2655
      %v2943 = vsel %vm2196, %v2293, %v2657
      %v2944 = vsel %vm2196, %v2295, %v2659
      %v2945 = vsel %vm2196, %v2296, %v2661
      %v2946 = vsel %vm2196, %v2298, %v2663
      %v2947 = vsel %vm2196, %v2299, %v2665
      %v2948 = vsel %vm2196, %v2301, %v2667
      %v2949 = vsel %vm2196, %v2302, %v2669
      %v2950 = vsel %vm2196, %v2304, %v2671
      %v2951 = vsel %vm2196, %v2305, %v2673
      %v2952 = vsel %vm2196, %v2307, %v2675
      %v2953 = vsel %vm2196, %v2308, %v2677
      %v2954 = vsel %vm2196, %v2310, %v2679
      %v2955 = vsel %vm2196, %v2311, %v2681
      %v2956 = vsel %vm2196, %v2313, %v2683
      %v2957 = vsel %vm2196, %v2314, %v2685
      %v2958 = vsel %vm2196, %v2316, %v2687
      %v2959 = vsel %vm2196, %v2317, %v2689
      %v2960 = vsel %vm2196, %v2319, %v2691
      %v2961 = vsel %vm2196, %v2320, %v2693
      %v2962 = vsel %vm2196, %v2458, %v2727
      %v2963 = vsel %vm2196, %v2460, %v2729
      %v2964 = vsel %vm2196, %v2463, %v2731
      %v2965 = vsel %vm2196, %v2465, %v2733
      %v2966 = vsel %vm2196, %v2468, %v2735
      %v2967 = vsel %vm2196, %v2470, %v2737
      %v2968 = vsel %vm2196, %v2473, %v2739
      %v2969 = vsel %vm2196, %v2475, %v2741
      %v2970 = vsel %vm2196, %v2478, %v2743
      %v2971 = vsel %vm2196, %v2480, %v2745
      %v2972 = vsel %vm2196, %v2483, %v2747
      %v2973 = vsel %vm2196, %v2485, %v2749
      %v2974 = vsel %vm2196, %v2488, %v2751
      %v2975 = vsel %vm2196, %v2490, %v2753
      %v2976 = vsel %vm2196, %v2493, %v2755
      %v2977 = vsel %vm2196, %v2495, %v2757
      %v2978 = vsel %vm2196, %v2498, %v2759
      %v2979 = vsel %vm2196, %v2500, %v2761
      %v2980 = vsel %vm2196, %v2503, %v2763
      %v2981 = vsel %vm2196, %v2505, %v2765
      %v2982 = vsel %vm2196, %v2508, %v2767
      %v2983 = vsel %vm2196, %v2510, %v2769
      %v2984 = vsel %vm2196, %v2513, %v2771
      %v2985 = vsel %vm2196, %v2515, %v2773
      %v2986 = vsel %vm2196, %v2518, %v2775
      %v2987 = vsel %vm2196, %v2520, %v2777
      %v2988 = vsel %vm2196, %v2523, %v2779
      %v2989 = vsel %vm2196, %v2525, %v2781
      %v2990 = vsel %vm2196, %v2528, %v2783
      %v2991 = vsel %vm2196, %v2530, %v2785
      %v2992 = vsel %vm2196, %v2533, %v2787
      %v2993 = vsel %vm2196, %v2535, %v2789
      %v2994 = vsel %vm2196, %v2383, %v2823
      %v2995 = vsel %vm2196, %v2385, %v2825
      %v2996 = vsel %vm2196, %v2388, %v2827
      %v2997 = vsel %vm2196, %v2390, %v2829
      %v2998 = vsel %vm2196, %v2393, %v2831
      %v2999 = vsel %vm2196, %v2395, %v2833
      %v3000 = vsel %vm2196, %v2398, %v2835
      %v3001 = vsel %vm2196, %v2400, %v2837
      %v3002 = vsel %vm2196, %v2403, %v2839
      %v3003 = vsel %vm2196, %v2405, %v2841
      %v3004 = vsel %vm2196, %v2408, %v2843
      %v3005 = vsel %vm2196, %v2410, %v2845
      %v3006 = vsel %vm2196, %v2413, %v2847
      %v3007 = vsel %vm2196, %v2415, %v2849
      %v3008 = vsel %vm2196, %v2418, %v2851
      %v3009 = vsel %vm2196, %v2420, %v2853
      %v3010 = vsel %vm2196, %v2423, %v2855
      %v3011 = vsel %vm2196, %v2425, %v2857
      %v3012 = vsel %vm2196, %v2428, %v2859
      %v3013 = vsel %vm2196, %v2430, %v2861
      %v3014 = vsel %vm2196, %v2433, %v2863
      %v3015 = vsel %vm2196, %v2435, %v2865
      %v3016 = vsel %vm2196, %v2438, %v2867
      %v3017 = vsel %vm2196, %v2440, %v2869
      %v3018 = vsel %vm2196, %v2443, %v2871
      %v3019 = vsel %vm2196, %v2445, %v2873
      %v3020 = vsel %vm2196, %v2448, %v2875
      %v3021 = vsel %vm2196, %v2450, %v2877
      %v3022 = vsel %vm2196, %v2453, %v2879
      %v3023 = vsel %vm2196, %v2455, %v2881
      %v3024 = vsel %vm2196, %v2573, %v2883
      %v3025 = vsel %vm2196, %v2575, %v2885
      %v3026 = vsel %vm2196, %v2322, %v2919
      %v3027 = vsel %vm2196, %v2323, %v2921
      %v3028 = vsel %vm2196, %v2325, %v2923
      %v3029 = vsel %vm2196, %v2326, %v2925
      %v3030 = vpack.c.bf16 %v2931, %v2930
      %v3031 = vpack.c.bf16 %v2963, %v2962
      %v3032 = vpack.c.bf16 %v2995, %v2994
      %v3033 = vpack.c.bf16 %v2935, %v2934
      %v3034 = vpack.c.bf16 %v2470, %v2468
      %v3035 = vpack.c.bf16 %v2933, %v2932
      %v3036 = vpack.c.bf16 %v2965, %v2964
      %v3037 = vpack.c.bf16 %v2997, %v2996
      %v3038 = vpack.c.bf16 %v2937, %v2936
      %v3039 = vpack.c.bf16 %v2475, %v2473
      %v3040 = vpack.c.bf16 %v2967, %v2966
      %v3041 = vpack.c.bf16 %v2999, %v2998
      %v3042 = vpack.c.bf16 %v2939, %v2938
      %v3043 = vpack.c.bf16 %v2480, %v2478
      %v3044 = vpack.c.bf16 %v2969, %v2968
      %v3045 = vpack.c.bf16 %v3001, %v3000
      %v3046 = vpack.c.bf16 %v2941, %v2940
      %v3047 = vpack.c.bf16 %v2485, %v2483
      %v3048 = vpack.c.bf16 %v2971, %v2970
      %v3049 = vpack.c.bf16 %v3003, %v3002
      %v3050 = vpack.c.bf16 %v2943, %v2942
      %v3051 = vpack.c.bf16 %v2490, %v2488
      %v3052 = vpack.c.bf16 %v2973, %v2972
      %v3053 = vpack.c.bf16 %v3005, %v3004
      %v3054 = vpack.c.bf16 %v2945, %v2944
      %v3055 = vpack.c.bf16 %v2495, %v2493
      %v3056 = vpack.c.bf16 %v2975, %v2974
      %v3057 = vpack.c.bf16 %v3007, %v3006
      %v3058 = vpack.c.bf16 %v2947, %v2946
      %v3059 = vpack.c.bf16 %v2500, %v2498
      %v3060 = vpack.c.bf16 %v2977, %v2976
      %v3061 = vpack.c.bf16 %v3009, %v3008
      %v3062 = vpack.c.bf16 %v2949, %v2948
      %v3063 = vpack.c.bf16 %v2505, %v2503
      %v3064 = vpack.c.bf16 %v2979, %v2978
      %v3065 = vpack.c.bf16 %v3011, %v3010
      %v3066 = vpack.c.bf16 %v2951, %v2950
      %v3067 = vpack.c.bf16 %v2510, %v2508
      %v3068 = vpack.c.bf16 %v2981, %v2980
      %v3069 = vpack.c.bf16 %v3013, %v3012
      %v3070 = vpack.c.bf16 %v2953, %v2952
      %v3071 = vpack.c.bf16 %v2515, %v2513
      %v3072 = vpack.c.bf16 %v2983, %v2982
      %v3073 = vpack.c.bf16 %v3015, %v3014
      %v3074 = vpack.c.bf16 %v2955, %v2954
      %v3075 = vpack.c.bf16 %v2520, %v2518
      %v3076 = vpack.c.bf16 %v2985, %v2984
      %v3077 = vpack.c.bf16 %v3017, %v3016
      %v3078 = vpack.c.bf16 %v2957, %v2956
      %v3079 = vpack.c.bf16 %v2525, %v2523
      %v3080 = vpack.c.bf16 %v2987, %v2986
      %v3081 = vpack.c.bf16 %v3019, %v3018
      %v3082 = vpack.c.bf16 %v2959, %v2958
      %v3083 = vpack.c.bf16 %v2530, %v2528
      %v3084 = vpack.c.bf16 %v2989, %v2988
      %v3085 = vpack.c.bf16 %v3021, %v3020
      %v3086 = vpack.c.bf16 %v2961, %v2960
      %v3087 = vpack.c.bf16 %v2535, %v2533
      %v3088 = vpack.c.bf16 %v2991, %v2990
      %v3089 = vpack.c.bf16 %v3023, %v3022
      %v3090 = vpack.c.bf16 %v3027, %v3026
      %v3091 = vpack.c.bf16 %v2612, %v2610
      %v3092 = vpack.c.bf16 %v2993, %v2992
      %v3093 = vpack.c.bf16 %v3025, %v3024
      %v3094 = vpack.c.bf16 %v3029, %v3028
      %v3095 = vpack.c.bf16 %v2625, %v2623
      %v3096 = vld [vmem:[%s4] sm:$0xff]
      %v3097 = vld [vmem:[%s4 + $0x8] sm:$0x3]
      %v3098 = vld [vmem:[%s5] sm:$0x7]
      %3100 = vset.pattern.permute.xlu0 0
      %3101 = vperm.xlu0 %3100, %v3098
      %v3102 = vpop.permute.xlu0 %3101
      %v3106 = vcombine.high %v3096, %v3096
      %v3108 = vunpack.c.l.s4 1983009808
      %v3109 = vunpack.c.0.s8 %v3108
      %v3110 = vlaneseq
      %v3111 = vshrl.u32 %v3110, 7
      %v3112 = vsub.s32 %v3109, %v3111
      %v3113 = vrot.slane %v3096, %v3112
      %v3115 = vunpack.c.l.s4 1983009808
      %v3116 = vunpack.c.0.s8 %v3115
      %v3117 = vlaneseq
      %v3118 = vshrl.u32 %v3117, 7
      %v3119 = vsub.s32 %v3116, %v3118
      %v3120 = vrot.slane %v3106, %v3119
      %v3121 = vcombine.high %v3113, %v3113
      %v3122 = vcombine.high %v3120, %v3120
      %v3124 = vunpack.c.l.s4 1983009808
      %v3125 = vunpack.c.0.s8 %v3124
      %v3126 = vlaneseq
      %v3127 = vshrl.u32 %v3126, 7
      %v3128 = vsub.s32 %v3125, %v3127
      %v3129 = vrot.slane %v3097, %v3128
      %v3135 = vsel %vm2196, %v3129, 0
      %v3138 = vsel %vm2196, %v3034, 0
      %v3141 = vsel %vm2196, %v3039, 0
      %v3144 = vsel %vm2196, %v3043, 0
      %v3147 = vsel %vm2196, %v3047, 0
      %v3150 = vsel %vm2196, %v3051, 0
      %v3153 = vsel %vm2196, %v3055, 0
      %v3156 = vsel %vm2196, %v3059, 0
      %v3159 = vsel %vm2196, %v3063, 0
      %v3162 = vsel %vm2196, %v3067, 0
      %v3165 = vsel %vm2196, %v3071, 0
      %v3168 = vsel %vm2196, %v3075, 0
      %v3171 = vsel %vm2196, %v3079, 0
      %v3174 = vsel %vm2196, %v3083, 0
      %v3177 = vsel %vm2196, %v3087, 0
      %v3180 = vsel %vm2196, %v3091, 0
      %v3183 = vsel %vm2196, %v3095, 0
      %3185 = vmatprep.subr.bf16.mxu0 %v3031
      %3186 = vmatpush1.bf16.xpose.msra.mxu0 %v3030
      %3187 = vmatprep.subr.bf16.mxu0 %v3036
      %3188 = vmatpush1.bf16.xpose.msra.mxu0 %v3035
      %3189 = vmatprep.subr.bf16.mxu0 %v3040
      %3190 = vmatpush1.bf16.xpose.msra.mxu0 %v3033
      %3191 = vmatprep.subr.bf16.mxu0 %v3044
      %3192 = vmatpush1.bf16.xpose.msra.mxu0 %v3038
      %3193 = vmatprep.subr.bf16.mxu0 %v3048
      %3194 = vmatpush1.bf16.xpose.msra.mxu0 %v3042
      %3195 = vmatprep.subr.bf16.mxu0 %v3052
      %3196 = vmatpush1.bf16.xpose.msra.mxu0 %v3046
      %3197 = vmatprep.subr.bf16.mxu0 %v3056
      %3198 = vmatpush1.bf16.xpose.msra.mxu0 %v3050
      %3199 = vmatprep.subr.bf16.mxu0 %v3060
      %3200 = vmatpush1.bf16.xpose.msra.mxu0 %v3054
      %3201 = vmatprep.subr.bf16.mxu0 %v3064
      %3202 = vmatpush1.bf16.xpose.msra.mxu0 %v3058
      %3203 = vmatprep.subr.bf16.mxu0 %v3068
      %3204 = vmatpush1.bf16.xpose.msra.mxu0 %v3062
      %3205 = vmatprep.subr.bf16.mxu0 %v3072
      %3206 = vmatpush1.bf16.xpose.msra.mxu0 %v3066
      %3207 = vmatprep.subr.bf16.mxu0 %v3076
      %3208 = vmatpush1.bf16.xpose.msra.mxu0 %v3070
      %3209 = vmatprep.subr.bf16.mxu0 %v3080
      %3210 = vmatpush1.bf16.xpose.msra.mxu0 %v3074
      %3211 = vmatprep.subr.bf16.mxu0 %v3084
      %3212 = vmatpush1.bf16.xpose.msra.mxu0 %v3078
      %3213 = vmatprep.subr.bf16.mxu0 %v3088
      %3214 = vmatpush1.bf16.xpose.msra.mxu0 %v3082
      %3215 = vmatprep.subr.bf16.mxu0 %v3092
      %3216 = vmatpush1.bf16.xpose.msra.mxu0 %v3086
      %3217 = vmatprep.mubr.bf16.mxu0 %v3121
      %3218 = vmatmul.mubr.bf16.gmra.mrb[0].mxu0 %v3113
      %v3219 = vpop.f32.mrb[0].mxu0
      %v3220 = vadd.f32 %v3102, %v3219
      %v3221 = vpop.f32.mrb[0].mxu0
      %v3222 = vadd.f32 %v3102, %v3221
      %v3223 = vpop.f32.mrb[0].mxu0
      %v3224 = vpop.f32.mrb[0].mxu0
      %3225 = vdwg.mxu0
      %3226 = vmatprep.subr.bf16.mxu0 %v3033
      %3227 = vmatpush1.bf16.xpose.msra.mxu0 %v3032
      %3228 = vmatprep.subr.bf16.mxu0 %v3038
      %3229 = vmatpush1.bf16.xpose.msra.mxu0 %v3037
      %3230 = vmatprep.subr.bf16.mxu0 %v3042
      %3231 = vmatpush1.bf16.xpose.msra.mxu0 %v3041
      %3232 = vmatprep.subr.bf16.mxu0 %v3046
      %3233 = vmatpush1.bf16.xpose.msra.mxu0 %v3045
      %3234 = vmatprep.subr.bf16.mxu0 %v3050
      %3235 = vmatpush1.bf16.xpose.msra.mxu0 %v3049
      %3236 = vmatprep.subr.bf16.mxu0 %v3054
      %3237 = vmatpush1.bf16.xpose.msra.mxu0 %v3053
      %3238 = vmatprep.subr.bf16.mxu0 %v3058
      %3239 = vmatpush1.bf16.xpose.msra.mxu0 %v3057
      %3240 = vmatprep.subr.bf16.mxu0 %v3062
      %3241 = vmatpush1.bf16.xpose.msra.mxu0 %v3061
      %3242 = vmatprep.subr.bf16.mxu0 %v3066
      %3243 = vmatpush1.bf16.xpose.msra.mxu0 %v3065
      %3244 = vmatprep.subr.bf16.mxu0 %v3070
      %3245 = vmatpush1.bf16.xpose.msra.mxu0 %v3069
      %3246 = vmatprep.subr.bf16.mxu0 %v3074
      %3247 = vmatpush1.bf16.xpose.msra.mxu0 %v3073
      %3248 = vmatprep.subr.bf16.mxu0 %v3078
      %3249 = vmatpush1.bf16.xpose.msra.mxu0 %v3077
      %3250 = vmatprep.subr.bf16.mxu0 %v3082
      %3251 = vmatpush1.bf16.xpose.msra.mxu0 %v3081
      %3252 = vmatprep.subr.bf16.mxu0 %v3086
      %3253 = vmatpush1.bf16.xpose.msra.mxu0 %v3085
      %3254 = vmatprep.subr.bf16.mxu0 %v3090
      %3255 = vmatpush1.bf16.xpose.msra.mxu0 %v3089
      %3256 = vmatprep.subr.bf16.mxu0 %v3094
      %3257 = vmatpush1.bf16.xpose.msra.mxu0 %v3093
      %3258 = vmatprep.mubr.bf16.mxu0 %v3122
      %3259 = vmatmul.mubr.bf16.gmra.mrb[0].mxu0 %v3120
      %v3260 = vpop.f32.mrb[0].mxu0
      %v3261 = vadd.f32 %v3220, %v3260
      %v3262 = vpop.f32.mrb[0].mxu0
      %v3263 = vadd.f32 %v3222, %v3262
      %v3264 = vpop.f32.mrb[0].mxu0
      %v3265 = vpop.f32.mrb[0].mxu0
      %3266 = vdwg.mxu0
      %3267 = vmatprep.subr.bf16.mxu0 0
      %3268 = vmatpush1.bf16.xpose.msra.mxu0 %v3138
      %3269 = vmatprep.subr.bf16.mxu0 0
      %3270 = vmatpush1.bf16.xpose.msra.mxu0 %v3141
      %3271 = vmatprep.subr.bf16.mxu0 0
      %3272 = vmatpush1.bf16.xpose.msra.mxu0 %v3144
      %3273 = vmatprep.subr.bf16.mxu0 0
      %3274 = vmatpush1.bf16.xpose.msra.mxu0 %v3147
      %3275 = vmatprep.subr.bf16.mxu0 0
      %3276 = vmatpush1.bf16.xpose.msra.mxu0 %v3150
      %3277 = vmatprep.subr.bf16.mxu0 0
      %3278 = vmatpush1.bf16.xpose.msra.mxu0 %v3153
      %3279 = vmatprep.subr.bf16.mxu0 0
      %3280 = vmatpush1.bf16.xpose.msra.mxu0 %v3156
      %3281 = vmatprep.subr.bf16.mxu0 0
      %3282 = vmatpush1.bf16.xpose.msra.mxu0 %v3159
      %3283 = vmatprep.subr.bf16.mxu0 0
      %3284 = vmatpush1.bf16.xpose.msra.mxu0 %v3162
      %3285 = vmatprep.subr.bf16.mxu0 0
      %3286 = vmatpush1.bf16.xpose.msra.mxu0 %v3165
      %3287 = vmatprep.subr.bf16.mxu0 0
      %3288 = vmatpush1.bf16.xpose.msra.mxu0 %v3168
      %3289 = vmatprep.subr.bf16.mxu0 0
      %3290 = vmatpush1.bf16.xpose.msra.mxu0 %v3171
      %3291 = vmatprep.subr.bf16.mxu0 0
      %3292 = vmatpush1.bf16.xpose.msra.mxu0 %v3174
      %3293 = vmatprep.subr.bf16.mxu0 0
      %3294 = vmatpush1.bf16.xpose.msra.mxu0 %v3177
      %3295 = vmatprep.subr.bf16.mxu0 0
      %3296 = vmatpush1.bf16.xpose.msra.mxu0 %v3180
      %3297 = vmatprep.subr.bf16.mxu0 0
      %3298 = vmatpush1.bf16.xpose.msra.mxu0 %v3183
      %3299 = vmatprep.mubr.bf16.mxu0 0
      %3300 = vmatmul.mubr.bf16.gmra.mrb[0].mxu0 %v3135
      %v3301 = vpop.f32.mrb[0].mxu0
      %v3302 = vadd.f32 %v3261, %v3301
      %v3303 = vpop.f32.mrb[0].mxu0
      %v3304 = vadd.f32 %v3263, %v3303
      %v3305 = vpop.f32.mrb[0].mxu0
      %v3306 = vpop.f32.mrb[0].mxu0
      %3307 = vdwg.mxu0
      %v3308 = vtanh.pop %v3302
      %v3309 = vtanh.pop %v3304
      %v3312 = vcombine.low %v3308, %v3309
      %3314 = vst [vmem:[%s265] sm:$0x77] %v3312
      %p3315 = scmp.lt.s32.totalorder %s17, 1
      %s3316 = scalar_select %p3315, %s17, 1
      %s3317 = smul.addr %s3316, 2
      %s3318 = smul.addr %s3317, 4
      %s3319 = scalar_lea.vmem %s6, %s3318
      // Predicated region
      $region45: #{stage2_generator_forward.1} parent=43 // pred_check
        %p3320 = pneg %p171
      $region46: #{stage2_generator_forward.1} parent=43 // pred_check_branch
        %3322 = sbr.rel (%p3320) target = $region48
      $region47: #{stage2_generator_forward.1} parent=43 // pred_region
        _
      $region48: #{stage2_generator_forward.1} parent=43 // pred_fallthru
        _
    $region44: #{stage2_generator_forward.1} parent=5 // pred_fallthru
      _
    %p3323 = scmp.le.s32.totalorder 2, %s12
    // Predicated region
    $region49: #{stage2_generator_forward.1} parent=5 // pred_check
      %p3324 = pneg %p3323
    $region50: #{stage2_generator_forward.1} parent=5 // pred_check_branch
      %3326 = sbr.rel (%p3324) target = $region52
    $region51: #{stage2_generator_forward.1} parent=5 // pred_region
      %s3327 = ssub.s32 %s12, 2
      // Predicated region
      $region53: #{stage2_generator_forward.1} parent=51 // pred_check
        %p3328 = pneg %p177
      $region54: #{stage2_generator_forward.1} parent=51 // pred_check_branch
        %3330 = sbr.rel (%p3328) target = $region56
      $region55: #{stage2_generator_forward.1} parent=51 // pred_region
        %p3331 = scmp.lt.s32.totalorder %s18, 1
        %s3332 = scalar_select %p3331, %s18, 1
        %s3333 = smul.addr %s3332, 2
        %s3334 = smul.addr %s3333, 4
        %s3335 = scalar_lea.vmem %s6, %s3334
      $region56: #{stage2_generator_forward.1} parent=51 // pred_fallthru
        _
    $region52: #{stage2_generator_forward.1} parent=5 // pred_fallthru
      _
  $region6: #{stage2_generator_forward.1} parent=0 // loop_footer
    %s16 = sadd.s32 1, %s12
  $region7: #{stage2_generator_forward.1} parent=0 // loop_footer_branch
    %11 = sbr.rel target = $region3
  $region8: #{stage2_generator_forward.1} parent=0 // loop_exit
    _

</llo_original>
